<compile_context>
chip_gen: v6e
topology: v6e:2x2x1
jax: 0.10.0
libtpu: 0.0.40
codegen_flags: <defaults>
</compile_context>

<pallas_src>
import jax
import jax.numpy as jnp
from jax.experimental import pallas as pl
from jax.experimental.pallas import tpu as pltpu

LANE = 128  # pad every feature dim to one full lane width


# ---------------------------------------------------------------------------
# helpers
# ---------------------------------------------------------------------------
def _full_spec(shape):
    """BlockSpec covering the whole array (grid=(1,))."""
    nd = len(shape)
    return pl.BlockSpec(shape, lambda i, _nd=nd: (0,) * _nd)


def _pad_weight(raw, rows, cols, dtype=jnp.bfloat16):
    """Zero-pad a weight matrix into a (rows, cols) container of `dtype`."""
    out = jnp.zeros((rows, cols), dtype)
    return out.at[: raw.shape[0], : raw.shape[1]].set(raw.astype(dtype))


def _gelu(x):
    # TODO(synk): tanh-approx GELU (guaranteed Mosaic lowering via EUP tanh);
    # switch to exact-erf if the reference encoders use torch.nn.GELU() default.
    return jax.nn.gelu(x, approximate=True)


def _connector_normalize(x_f32, w1_ref, b1_ref, w2_ref, b2_ref):
    """ModularConnector (Linear -> GELU -> Linear) fused with F.normalize(dim=1).

    x_f32: (B, LANE) f32.  Padded columns stay exactly zero, so the L2 norm
    over the padded 128 lanes equals the norm over the real embed dim.
    """
    h = jnp.dot(x_f32.astype(jnp.bfloat16), w1_ref[...],
                preferred_element_type=jnp.float32)
    h = _gelu(h + b1_ref[...])
    y = jnp.dot(h.astype(jnp.bfloat16), w2_ref[...],
                preferred_element_type=jnp.float32)
    y = y + b2_ref[...]
    ss = jnp.maximum(jnp.sum(y * y, axis=-1, keepdims=True), 1e-24)
    inv = jax.lax.rsqrt(ss)                      # EUP rsqrt (approx)
    inv = inv * (1.5 - 0.5 * ss * inv * inv)     # one Newton step -> f32 accuracy
    return y * inv                               # == y / max(||y||, 1e-12)


# ---------------------------------------------------------------------------
# the single fused kernel
# ---------------------------------------------------------------------------
def siglip_fused_kernel(
    # image branch inputs
    patches_ref, pool_ref, w_patch_ref, b_patch_ref,
    w_iproj_ref, b_iproj_ref, iw1_ref, ib1_ref, iw2_ref, ib2_ref,
    # text branch inputs
    ids_ref, maskf_ref, mask_ref, seg_ref, tok_ref,
    w_tproj_ref, b_tproj_ref, tw1_ref, tb1_ref, tw2_ref, tb2_ref,
    # outputs
    img_out_ref, txt_out_ref,
):
    # ---------------- image branch ----------------
    # patch embed ("conv" as matmul) + GELU, per-patch projection, mean pool
    # (as a tiny MXU matmul against a (B, B*P) pooling matrix), connector MLP
    # and L2-normalize — all fused, all activations 2-D and lane-dense.
    p = patches_ref[...].astype(jnp.bfloat16)                           # (BP, K)
    h = jnp.dot(p, w_patch_ref[...], preferred_element_type=jnp.float32)
    h = _gelu(h + b_patch_ref[...])                                     # (BP, LANE)
    y = jnp.dot(h.astype(jnp.bfloat16), w_iproj_ref[...],
                preferred_element_type=jnp.float32)                     # (BP, LANE)
    pooled = jnp.dot(pool_ref[...], y.astype(jnp.bfloat16),
                     preferred_element_type=jnp.float32)                # (B, LANE)
    img_feat = pooled + b_iproj_ref[...]
    img_out_ref[...] = _connector_normalize(
        img_feat, iw1_ref, ib1_ref, iw2_ref, ib2_ref)

    # ---------------- text branch -----------------
    # Token gather as a mask-weighted one-hot matmul (keeps the (B, S, Dm)
    # embedding tensor out of HBM), per-token projection (M = B*S), masked
    # mean pool via a (B, B*S) segment matmul, connector MLP, L2-normalize.
    BS = ids_ref.shape[0]
    V = tok_ref.shape[0]
    ids = ids_ref[...]                                                  # (BS, 1) i32
    iota_v = jax.lax.broadcasted_iota(jnp.int32, (BS, V), 1)
    onehot = (ids == iota_v).astype(jnp.float32) * maskf_ref[...]       # (BS, V)
    emb = jnp.dot(onehot.astype(jnp.bfloat16), tok_ref[...],
                  preferred_element_type=jnp.float32)                   # (BS, LANE)
    t = jnp.dot(emb.astype(jnp.bfloat16), w_tproj_ref[...],
                preferred_element_type=jnp.float32)                     # (BS, LANE)
    summed = jnp.dot(seg_ref[...], t.astype(jnp.bfloat16),
                     preferred_element_type=jnp.float32)                # (B, LANE)
    denom = jnp.maximum(jnp.sum(mask_ref[...], axis=1, keepdims=True), 1e-9)
    txt_feat = summed / denom + b_tproj_ref[...]
    txt_out_ref[...] = _connector_normalize(
        txt_feat, tw1_ref, tb1_ref, tw2_ref, tb2_ref)


# ---------------------------------------------------------------------------
# SigLIP model (parameters + forward)
# ---------------------------------------------------------------------------
class SigLIPPallas:
    def __init__(
        self,
        key,
        *,
        in_channels=3,
        patch=8,
        vision_d_model=32,
        image_embedding_size=32,
        vocab_size=64,
        text_d_model=32,
        text_embedding_size=32,
        connector_hidden=32,
        embed_dim=32,
    ):
        self.patch = patch
        self.embed_dim = embed_dim
        s = 0.02
        K = in_channels * patch * patch
        k = jax.random.split(key, 8)

        def init_w(kk, rows, cols, pad_rows, pad_cols):
            raw = s * jax.random.normal(kk, (rows, cols), jnp.float32)
            return _pad_weight(raw, pad_rows, pad_cols)   # bf16, zero-padded

        # ImageEncoder: patch-embed conv (as matmul) + GELU + mean pool + proj
        self.w_patch = init_w(k[0], K, vision_d_model, K, LANE)
        self.b_patch = jnp.zeros((1, LANE), jnp.float32)
        self.w_img_proj = init_w(k[1], vision_d_model, image_embedding_size,
                                 LANE, LANE)
        self.b_img_proj = jnp.zeros((1, LANE), jnp.float32)

        # TextEncoder: token embedding + masked mean pool + proj
        self.tok_emb = init_w(k[2], vocab_size, text_d_model, vocab_size, LANE)
        self.w_txt_proj = init_w(k[3], text_d_model, text_embedding_size,
                                 LANE, LANE)
        self.b_txt_proj = jnp.zeros((1, LANE), jnp.float32)

        # image ModularConnector (Linear -> GELU -> Linear)
        self.iw1 = init_w(k[4], image_embedding_size, connector_hidden, LANE, LANE)
        self.ib1 = jnp.zeros((1, LANE), jnp.float32)
        self.iw2 = init_w(k[5], connector_hidden, embed_dim, LANE, LANE)
        self.ib2 = jnp.zeros((1, LANE), jnp.float32)

        # text ModularConnector
        self.tw1 = init_w(k[6], text_embedding_size, connector_hidden, LANE, LANE)
        self.tb1 = jnp.zeros((1, LANE), jnp.float32)
        self.tw2 = init_w(k[7], connector_hidden, embed_dim, LANE, LANE)
        self.tb2 = jnp.zeros((1, LANE), jnp.float32)

        self._forward = jax.jit(self._forward_impl)

    # -- image patchify (layout plumbing) ------------------------------------
    def _patchify(self, images):
        # images: (B, C, H, W) NCHW -> (B*P, C*ph*pw) row-major patches
        # TODO(synk): at production image sizes express this patch extraction
        # through the kernel's BlockSpec / allow_input_fusion instead of a
        # wrapper-side transpose materialization.
        B, C, H, W = images.shape
        p = self.patch
        x = images.reshape(B, C, H // p, p, W // p, p)
        x = jnp.transpose(x, (0, 2, 4, 1, 3, 5))          # (B, Hp, Wp, C, p, p)
        P = (H // p) * (W // p)
        return x.reshape(B * P, C * p * p), P

    # -- fused forward --------------------------------------------------------
    def _forward_impl(self, images, input_ids, attention_mask):
        B = images.shape[0]
        patches, P = self._patchify(images)
        patches = patches.astype(jnp.bfloat16)
        # mean-pool over patches as a (B, B*P) matmul
        pool = (jnp.repeat(jnp.eye(B, dtype=jnp.float32), P, axis=1) / P
                ).astype(jnp.bfloat16)

        S = input_ids.shape[1]
        mask = attention_mask.astype(jnp.float32)                  # (B, S)
        ids_flat = input_ids.reshape(B * S, 1).astype(jnp.int32)   # (B*S, 1)
        mask_flat = mask.reshape(B * S, 1)                         # (B*S, 1)
        # segment-sum over tokens as a (B, B*S) matmul
        seg = jnp.repeat(jnp.eye(B, dtype=jnp.float32), S, axis=1
                         ).astype(jnp.bfloat16)

        inputs = (
            patches, pool, self.w_patch, self.b_patch,
            self.w_img_proj, self.b_img_proj,
            self.iw1, self.ib1, self.iw2, self.ib2,
            ids_flat, mask_flat, mask, seg, self.tok_emb,
            self.w_txt_proj, self.b_txt_proj,
            self.tw1, self.tb1, self.tw2, self.tb2,
        )

        out_shapes = (jax.ShapeDtypeStruct((B, LANE), jnp.float32),
                      jax.ShapeDtypeStruct((B, LANE), jnp.float32))

        img_pad, txt_pad = pl.pallas_call(
            siglip_fused_kernel,
            grid=(1,),
            in_specs=[_full_spec(x.shape) for x in inputs],
            out_specs=tuple(_full_spec(o.shape) for o in out_shapes),
            out_shape=out_shapes,
            compiler_params=pltpu.CompilerParams(
                dimension_semantics=("arbitrary",)),
        )(*inputs)

        # strip lane padding back to the real embedding size
        return img_pad[:, : self.embed_dim], txt_pad[:, : self.embed_dim]

    def __call__(self, images, texts):
        return self._forward(images, texts["input_ids"], texts["attention_mask"])


# ---------------------------------------------------------------------------
# main
# ---------------------------------------------------------------------------
if __name__ == "__main__":
    key = jax.random.PRNGKey(0)
    k_model, k_img, k_ids = jax.random.split(key, 3)

    B, C, H, W = 2, 3, 16, 16
    S, vocab = 8, 64

    model = SigLIPPallas(k_model)

    images = jax.random.normal(k_img, (B, C, H, W), jnp.float32)
    input_ids = jax.random.randint(k_ids, (B, S), 0, vocab, jnp.int32)
    attention_mask = jnp.array(
        [[1, 1, 1, 1, 1, 1, 1, 1],
         [1, 1, 1, 1, 1, 0, 0, 0]], jnp.int32)
    texts = {"input_ids": input_ids, "attention_mask": attention_mask}

    img_emb, txt_emb = model(images, texts)
    jax.block_until_ready((img_emb, txt_emb))

    assert img_emb.shape == (B, 32) and txt_emb.shape == (B, 32)
    assert jnp.all(jnp.isfinite(img_emb)) and jnp.all(jnp.isfinite(txt_emb))
    # embeddings are L2-normalized along dim=1 (as torch.nn.functional.normalize)
    assert jnp.allclose(jnp.linalg.norm(img_emb, axis=1), 1.0, atol=1e-3)
    assert jnp.allclose(jnp.linalg.norm(txt_emb, axis=1), 1.0, atol=1e-3)

    print("KERNEL_OK")
</pallas_src>

<mosaic_0001>
module attributes {stable_mosaic.version = 11 : i64} {
  func.func @siglip_fused_kernel(%arg0: i32, %arg1: memref<8x192xbf16, #tpu.memory_space<vmem>>, %arg2: memref<2x8xbf16, #tpu.memory_space<vmem>>, %arg3: memref<192x128xbf16, #tpu.memory_space<vmem>>, %arg4: memref<1x128xf32, #tpu.memory_space<vmem>>, %arg5: memref<128x128xbf16, #tpu.memory_space<vmem>>, %arg6: memref<1x128xf32, #tpu.memory_space<vmem>>, %arg7: memref<128x128xbf16, #tpu.memory_space<vmem>>, %arg8: memref<1x128xf32, #tpu.memory_space<vmem>>, %arg9: memref<128x128xbf16, #tpu.memory_space<vmem>>, %arg10: memref<1x128xf32, #tpu.memory_space<vmem>>, %arg11: memref<16x1xi32, #tpu.memory_space<vmem>>, %arg12: memref<16x1xf32, #tpu.memory_space<vmem>>, %arg13: memref<2x8xf32, #tpu.memory_space<vmem>>, %arg14: memref<2x16xbf16, #tpu.memory_space<vmem>>, %arg15: memref<64x128xbf16, #tpu.memory_space<vmem>>, %arg16: memref<128x128xbf16, #tpu.memory_space<vmem>>, %arg17: memref<1x128xf32, #tpu.memory_space<vmem>>, %arg18: memref<128x128xbf16, #tpu.memory_space<vmem>>, %arg19: memref<1x128xf32, #tpu.memory_space<vmem>>, %arg20: memref<128x128xbf16, #tpu.memory_space<vmem>>, %arg21: memref<1x128xf32, #tpu.memory_space<vmem>>, %arg22: memref<2x128xf32, #tpu.memory_space<vmem>>, %arg23: memref<2x128xf32, #tpu.memory_space<vmem>>) attributes {dimension_semantics = [#tpu.dimension_semantics<arbitrary>], iteration_bounds = array<i64: 1>, scalar_prefetch = 0 : i64, scratch_operands = 0 : i64, tpu.core_type = #tpu.core_type<tc>, window_params = [{pipeline_mode = #tpu.pipeline_mode<synchronous>, transform_indices = @transform_0, window_bounds = array<i64: 8, 192>}, {pipeline_mode = #tpu.pipeline_mode<synchronous>, transform_indices = @transform_1, window_bounds = array<i64: 2, 8>}, {pipeline_mode = #tpu.pipeline_mode<synchronous>, transform_indices = @transform_2, window_bounds = array<i64: 192, 128>}, {pipeline_mode = #tpu.pipeline_mode<synchronous>, transform_indices = @transform_3, window_bounds = array<i64: 1, 128>}, {pipeline_mode = #tpu.pipeline_mode<synchronous>, transform_indices = @transform_4, window_bounds = array<i64: 128, 128>}, {pipeline_mode = #tpu.pipeline_mode<synchronous>, transform_indices = @transform_5, window_bounds = array<i64: 1, 128>}, {pipeline_mode = #tpu.pipeline_mode<synchronous>, transform_indices = @transform_6, window_bounds = array<i64: 128, 128>}, {pipeline_mode = #tpu.pipeline_mode<synchronous>, transform_indices = @transform_7, window_bounds = array<i64: 1, 128>}, {pipeline_mode = #tpu.pipeline_mode<synchronous>, transform_indices = @transform_8, window_bounds = array<i64: 128, 128>}, {pipeline_mode = #tpu.pipeline_mode<synchronous>, transform_indices = @transform_9, window_bounds = array<i64: 1, 128>}, {pipeline_mode = #tpu.pipeline_mode<synchronous>, transform_indices = @transform_10, window_bounds = array<i64: 16, 1>}, {pipeline_mode = #tpu.pipeline_mode<synchronous>, transform_indices = @transform_11, window_bounds = array<i64: 16, 1>}, {pipeline_mode = #tpu.pipeline_mode<synchronous>, transform_indices = @transform_12, window_bounds = array<i64: 2, 8>}, {pipeline_mode = #tpu.pipeline_mode<synchronous>, transform_indices = @transform_13, window_bounds = array<i64: 2, 16>}, {pipeline_mode = #tpu.pipeline_mode<synchronous>, transform_indices = @transform_14, window_bounds = array<i64: 64, 128>}, {pipeline_mode = #tpu.pipeline_mode<synchronous>, transform_indices = @transform_15, window_bounds = array<i64: 128, 128>}, {pipeline_mode = #tpu.pipeline_mode<synchronous>, transform_indices = @transform_16, window_bounds = array<i64: 1, 128>}, {pipeline_mode = #tpu.pipeline_mode<synchronous>, transform_indices = @transform_17, window_bounds = array<i64: 128, 128>}, {pipeline_mode = #tpu.pipeline_mode<synchronous>, transform_indices = @transform_18, window_bounds = array<i64: 1, 128>}, {pipeline_mode = #tpu.pipeline_mode<synchronous>, transform_indices = @transform_19, window_bounds = array<i64: 128, 128>}, {pipeline_mode = #tpu.pipeline_mode<synchronous>, transform_indices = @transform_20, window_bounds = array<i64: 1, 128>}, {pipeline_mode = #tpu.pipeline_mode<synchronous>, transform_indices = @transform_21, window_bounds = array<i64: 2, 128>}, {pipeline_mode = #tpu.pipeline_mode<synchronous>, transform_indices = @transform_22, window_bounds = array<i64: 2, 128>}]} {
    %c0 = arith.constant 0 : index
    %c0_0 = arith.constant 0 : index
    %0 = vector.load %arg1[%c0, %c0_0] : memref<8x192xbf16, #tpu.memory_space<vmem>>, vector<8x192xbf16>
    %c0_1 = arith.constant 0 : index
    %c0_2 = arith.constant 0 : index
    %1 = vector.load %arg3[%c0_1, %c0_2] : memref<192x128xbf16, #tpu.memory_space<vmem>>, vector<192x128xbf16>
    %cst = arith.constant dense<0.000000e+00> : vector<8x128xf32>
    %2 = tpu.matmul %0, %1, %cst {dimension_numbers = #tpu.dot_dimension_numbers<[1], [0], [0], [1], [0, 0, 1, 1], [], []>} : vector<8x192xbf16>, vector<192x128xbf16>, vector<8x128xf32> -> vector<8x128xf32>
    %c0_3 = arith.constant 0 : index
    %c0_4 = arith.constant 0 : index
    %3 = vector.load %arg4[%c0_3, %c0_4] : memref<1x128xf32, #tpu.memory_space<vmem>>, vector<1x128xf32>
    %4 = vector.broadcast %3 : vector<1x128xf32> to vector<8x128xf32>
    %5 = arith.addf %2, %4 : vector<8x128xf32>
    %6 = arith.mulf %5, %5 : vector<8x128xf32>
    %7 = arith.mulf %5, %6 : vector<8x128xf32>
    %cst_5 = arith.constant 4.471500e-02 : f32
    %8 = vector.broadcast %cst_5 : f32 to vector<8x128xf32>
    %9 = arith.mulf %8, %7 : vector<8x128xf32>
    %10 = arith.addf %5, %9 : vector<8x128xf32>
    %cst_6 = arith.constant 0.797884583 : f32
    %11 = vector.broadcast %cst_6 : f32 to vector<8x128xf32>
    %12 = arith.mulf %11, %10 : vector<8x128xf32>
    %13 = math.tanh %12 : vector<8x128xf32>
    %cst_7 = arith.constant 1.000000e+00 : f32
    %14 = vector.broadcast %cst_7 : f32 to vector<8x128xf32>
    %15 = arith.addf %14, %13 : vector<8x128xf32>
    %cst_8 = arith.constant 5.000000e-01 : f32
    %16 = vector.broadcast %cst_8 : f32 to vector<8x128xf32>
    %17 = arith.mulf %16, %15 : vector<8x128xf32>
    %18 = arith.mulf %5, %17 : vector<8x128xf32>
    %19 = arith.truncf %18 : vector<8x128xf32> to vector<8x128xbf16>
    %c0_9 = arith.constant 0 : index
    %c0_10 = arith.constant 0 : index
    %20 = vector.load %arg5[%c0_9, %c0_10] : memref<128x128xbf16, #tpu.memory_space<vmem>>, vector<128x128xbf16>
    %cst_11 = arith.constant dense<0.000000e+00> : vector<8x128xf32>
    %21 = tpu.matmul %19, %20, %cst_11 {dimension_numbers = #tpu.dot_dimension_numbers<[1], [0], [0], [1], [0, 0, 1, 1], [], []>} : vector<8x128xbf16>, vector<128x128xbf16>, vector<8x128xf32> -> vector<8x128xf32>
    %c0_12 = arith.constant 0 : index
    %c0_13 = arith.constant 0 : index
    %22 = vector.load %arg2[%c0_12, %c0_13] : memref<2x8xbf16, #tpu.memory_space<vmem>>, vector<2x8xbf16>
    %23 = arith.truncf %21 : vector<8x128xf32> to vector<8x128xbf16>
    %cst_14 = arith.constant dense<0.000000e+00> : vector<2x128xf32>
    %24 = tpu.matmul %22, %23, %cst_14 {dimension_numbers = #tpu.dot_dimension_numbers<[1], [0], [0], [1], [0, 0, 1, 1], [], []>} : vector<2x8xbf16>, vector<8x128xbf16>, vector<2x128xf32> -> vector<2x128xf32>
    %c0_15 = arith.constant 0 : index
    %c0_16 = arith.constant 0 : index
    %25 = vector.load %arg6[%c0_15, %c0_16] : memref<1x128xf32, #tpu.memory_space<vmem>>, vector<1x128xf32>
    %26 = vector.broadcast %25 : vector<1x128xf32> to vector<2x128xf32>
    %27 = arith.addf %24, %26 : vector<2x128xf32>
    %28 = arith.truncf %27 : vector<2x128xf32> to vector<2x128xbf16>
    %c0_17 = arith.constant 0 : index
    %c0_18 = arith.constant 0 : index
    %29 = vector.load %arg7[%c0_17, %c0_18] : memref<128x128xbf16, #tpu.memory_space<vmem>>, vector<128x128xbf16>
    %cst_19 = arith.constant dense<0.000000e+00> : vector<2x128xf32>
    %30 = tpu.matmul %28, %29, %cst_19 {dimension_numbers = #tpu.dot_dimension_numbers<[1], [0], [0], [1], [0, 0, 1, 1], [], []>} : vector<2x128xbf16>, vector<128x128xbf16>, vector<2x128xf32> -> vector<2x128xf32>
    %c0_20 = arith.constant 0 : index
    %c0_21 = arith.constant 0 : index
    %31 = vector.load %arg8[%c0_20, %c0_21] : memref<1x128xf32, #tpu.memory_space<vmem>>, vector<1x128xf32>
    %32 = vector.broadcast %31 : vector<1x128xf32> to vector<2x128xf32>
    %33 = arith.addf %30, %32 : vector<2x128xf32>
    %34 = arith.mulf %33, %33 : vector<2x128xf32>
    %35 = arith.mulf %33, %34 : vector<2x128xf32>
    %cst_22 = arith.constant 4.471500e-02 : f32
    %36 = vector.broadcast %cst_22 : f32 to vector<2x128xf32>
    %37 = arith.mulf %36, %35 : vector<2x128xf32>
    %38 = arith.addf %33, %37 : vector<2x128xf32>
    %cst_23 = arith.constant 0.797884583 : f32
    %39 = vector.broadcast %cst_23 : f32 to vector<2x128xf32>
    %40 = arith.mulf %39, %38 : vector<2x128xf32>
    %41 = math.tanh %40 : vector<2x128xf32>
    %cst_24 = arith.constant 1.000000e+00 : f32
    %42 = vector.broadcast %cst_24 : f32 to vector<2x128xf32>
    %43 = arith.addf %42, %41 : vector<2x128xf32>
    %cst_25 = arith.constant 5.000000e-01 : f32
    %44 = vector.broadcast %cst_25 : f32 to vector<2x128xf32>
    %45 = arith.mulf %44, %43 : vector<2x128xf32>
    %46 = arith.mulf %33, %45 : vector<2x128xf32>
    %47 = arith.truncf %46 : vector<2x128xf32> to vector<2x128xbf16>
    %c0_26 = arith.constant 0 : index
    %c0_27 = arith.constant 0 : index
    %48 = vector.load %arg9[%c0_26, %c0_27] : memref<128x128xbf16, #tpu.memory_space<vmem>>, vector<128x128xbf16>
    %cst_28 = arith.constant dense<0.000000e+00> : vector<2x128xf32>
    %49 = tpu.matmul %47, %48, %cst_28 {dimension_numbers = #tpu.dot_dimension_numbers<[1], [0], [0], [1], [0, 0, 1, 1], [], []>} : vector<2x128xbf16>, vector<128x128xbf16>, vector<2x128xf32> -> vector<2x128xf32>
    %c0_29 = arith.constant 0 : index
    %c0_30 = arith.constant 0 : index
    %50 = vector.load %arg10[%c0_29, %c0_30] : memref<1x128xf32, #tpu.memory_space<vmem>>, vector<1x128xf32>
    %51 = vector.broadcast %50 : vector<1x128xf32> to vector<2x128xf32>
    %52 = arith.addf %49, %51 : vector<2x128xf32>
    %53 = arith.mulf %52, %52 : vector<2x128xf32>
    %cst_31 = arith.constant dense<0.000000e+00> : vector<2xf32>
    %54 = vector.multi_reduction <add>, %53, %cst_31 [1] : vector<2x128xf32> to vector<2xf32>
    %55 = vector.shape_cast %54 : vector<2xf32> to vector<2x1xf32>
    %cst_32 = arith.constant 1.000000e-24 : f32
    %56 = vector.broadcast %cst_32 : f32 to vector<2x1xf32>
    %57 = arith.maximumf %55, %56 : vector<2x1xf32>
    %58 = math.rsqrt %57 : vector<2x1xf32>
    %cst_33 = arith.constant 5.000000e-01 : f32
    %59 = vector.broadcast %cst_33 : f32 to vector<2x1xf32>
    %60 = arith.mulf %59, %57 : vector<2x1xf32>
    %61 = arith.mulf %60, %58 : vector<2x1xf32>
    %62 = arith.mulf %61, %58 : vector<2x1xf32>
    %cst_34 = arith.constant 1.500000e+00 : f32
    %63 = vector.broadcast %cst_34 : f32 to vector<2x1xf32>
    %64 = arith.subf %63, %62 : vector<2x1xf32>
    %65 = arith.mulf %58, %64 : vector<2x1xf32>
    %66 = vector.broadcast %65 : vector<2x1xf32> to vector<2x128xf32>
    %67 = arith.mulf %52, %66 : vector<2x128xf32>
    %c0_35 = arith.constant 0 : index
    %c0_36 = arith.constant 0 : index
    %68 = vector.load %arg22[%c0_35, %c0_36] : memref<2x128xf32, #tpu.memory_space<vmem>>, vector<2x128xf32>
    tpu.vector_store %arg22[%c0_35, %c0_36], %67 {strides = array<i32>} : memref<2x128xf32, #tpu.memory_space<vmem>>, vector<2x128xf32>,
    %c0_37 = arith.constant 0 : index
    %c0_38 = arith.constant 0 : index
    %69 = vector.load %arg11[%c0_37, %c0_38] : memref<16x1xi32, #tpu.memory_space<vmem>>, vector<16x1xi32>
    %70 = tpu.iota {dimensions = array<i32: 1>} : vector<16x64xi32>
    %71 = vector.broadcast %69 : vector<16x1xi32> to vector<16x64xi32>
    %72 = arith.cmpi eq, %71, %70 : vector<16x64xi32>
    %73 = arith.extui %72 : vector<16x64xi1> to vector<16x64xi32>
    %74 = arith.sitofp %73 : vector<16x64xi32> to vector<16x64xf32>
    %c0_39 = arith.constant 0 : index
    %c0_40 = arith.constant 0 : index
    %75 = vector.load %arg12[%c0_39, %c0_40] : memref<16x1xf32, #tpu.memory_space<vmem>>, vector<16x1xf32>
    %76 = vector.broadcast %75 : vector<16x1xf32> to vector<16x64xf32>
    %77 = arith.mulf %74, %76 : vector<16x64xf32>
    %78 = arith.truncf %77 : vector<16x64xf32> to vector<16x64xbf16>
    %c0_41 = arith.constant 0 : index
    %c0_42 = arith.constant 0 : index
    %79 = vector.load %arg15[%c0_41, %c0_42] : memref<64x128xbf16, #tpu.memory_space<vmem>>, vector<64x128xbf16>
    %cst_43 = arith.constant dense<0.000000e+00> : vector<16x128xf32>
    %80 = tpu.matmul %78, %79, %cst_43 {dimension_numbers = #tpu.dot_dimension_numbers<[1], [0], [0], [1], [0, 0, 1, 1], [], []>} : vector<16x64xbf16>, vector<64x128xbf16>, vector<16x128xf32> -> vector<16x128xf32>
    %81 = arith.truncf %80 : vector<16x128xf32> to vector<16x128xbf16>
    %c0_44 = arith.constant 0 : index
    %c0_45 = arith.constant 0 : index
    %82 = vector.load %arg16[%c0_44, %c0_45] : memref<128x128xbf16, #tpu.memory_space<vmem>>, vector<128x128xbf16>
    %cst_46 = arith.constant dense<0.000000e+00> : vector<16x128xf32>
    %83 = tpu.matmul %81, %82, %cst_46 {dimension_numbers = #tpu.dot_dimension_numbers<[1], [0], [0], [1], [0, 0, 1, 1], [], []>} : vector<16x128xbf16>, vector<128x128xbf16>, vector<16x128xf32> -> vector<16x128xf32>
    %c0_47 = arith.constant 0 : index
    %c0_48 = arith.constant 0 : index
    %84 = vector.load %arg14[%c0_47, %c0_48] : memref<2x16xbf16, #tpu.memory_space<vmem>>, vector<2x16xbf16>
    %85 = arith.truncf %83 : vector<16x128xf32> to vector<16x128xbf16>
    %cst_49 = arith.constant dense<0.000000e+00> : vector<2x128xf32>
    %86 = tpu.matmul %84, %85, %cst_49 {dimension_numbers = #tpu.dot_dimension_numbers<[1], [0], [0], [1], [0, 0, 1, 1], [], []>} : vector<2x16xbf16>, vector<16x128xbf16>, vector<2x128xf32> -> vector<2x128xf32>
    %c0_50 = arith.constant 0 : index
    %c0_51 = arith.constant 0 : index
    %87 = vector.load %arg13[%c0_50, %c0_51] : memref<2x8xf32, #tpu.memory_space<vmem>>, vector<2x8xf32>
    %cst_52 = arith.constant dense<0.000000e+00> : vector<2xf32>
    %88 = vector.multi_reduction <add>, %87, %cst_52 [1] : vector<2x8xf32> to vector<2xf32>
    %89 = vector.shape_cast %88 : vector<2xf32> to vector<2x1xf32>
    %cst_53 = arith.constant 9.99999971E-10 : f32
    %90 = vector.broadcast %cst_53 : f32 to vector<2x1xf32>
    %91 = arith.maximumf %89, %90 : vector<2x1xf32>
    %92 = vector.broadcast %91 : vector<2x1xf32> to vector<2x128xf32>
    %93 = arith.divf %86, %92 : vector<2x128xf32>
    %c0_54 = arith.constant 0 : index
    %c0_55 = arith.constant 0 : index
    %94 = vector.load %arg17[%c0_54, %c0_55] : memref<1x128xf32, #tpu.memory_space<vmem>>, vector<1x128xf32>
    %95 = vector.broadcast %94 : vector<1x128xf32> to vector<2x128xf32>
    %96 = arith.addf %93, %95 : vector<2x128xf32>
    %97 = arith.truncf %96 : vector<2x128xf32> to vector<2x128xbf16>
    %c0_56 = arith.constant 0 : index
    %c0_57 = arith.constant 0 : index
    %98 = vector.load %arg18[%c0_56, %c0_57] : memref<128x128xbf16, #tpu.memory_space<vmem>>, vector<128x128xbf16>
    %cst_58 = arith.constant dense<0.000000e+00> : vector<2x128xf32>
    %99 = tpu.matmul %97, %98, %cst_58 {dimension_numbers = #tpu.dot_dimension_numbers<[1], [0], [0], [1], [0, 0, 1, 1], [], []>} : vector<2x128xbf16>, vector<128x128xbf16>, vector<2x128xf32> -> vector<2x128xf32>
    %c0_59 = arith.constant 0 : index
    %c0_60 = arith.constant 0 : index
    %100 = vector.load %arg19[%c0_59, %c0_60] : memref<1x128xf32, #tpu.memory_space<vmem>>, vector<1x128xf32>
    %101 = vector.broadcast %100 : vector<1x128xf32> to vector<2x128xf32>
    %102 = arith.addf %99, %101 : vector<2x128xf32>
    %103 = arith.mulf %102, %102 : vector<2x128xf32>
    %104 = arith.mulf %102, %103 : vector<2x128xf32>
    %cst_61 = arith.constant 4.471500e-02 : f32
    %105 = vector.broadcast %cst_61 : f32 to vector<2x128xf32>
    %106 = arith.mulf %105, %104 : vector<2x128xf32>
    %107 = arith.addf %102, %106 : vector<2x128xf32>
    %cst_62 = arith.constant 0.797884583 : f32
    %108 = vector.broadcast %cst_62 : f32 to vector<2x128xf32>
    %109 = arith.mulf %108, %107 : vector<2x128xf32>
    %110 = math.tanh %109 : vector<2x128xf32>
    %cst_63 = arith.constant 1.000000e+00 : f32
    %111 = vector.broadcast %cst_63 : f32 to vector<2x128xf32>
    %112 = arith.addf %111, %110 : vector<2x128xf32>
    %cst_64 = arith.constant 5.000000e-01 : f32
    %113 = vector.broadcast %cst_64 : f32 to vector<2x128xf32>
    %114 = arith.mulf %113, %112 : vector<2x128xf32>
    %115 = arith.mulf %102, %114 : vector<2x128xf32>
    %116 = arith.truncf %115 : vector<2x128xf32> to vector<2x128xbf16>
    %c0_65 = arith.constant 0 : index
    %c0_66 = arith.constant 0 : index
    %117 = vector.load %arg20[%c0_65, %c0_66] : memref<128x128xbf16, #tpu.memory_space<vmem>>, vector<128x128xbf16>
    %cst_67 = arith.constant dense<0.000000e+00> : vector<2x128xf32>
    %118 = tpu.matmul %116, %117, %cst_67 {dimension_numbers = #tpu.dot_dimension_numbers<[1], [0], [0], [1], [0, 0, 1, 1], [], []>} : vector<2x128xbf16>, vector<128x128xbf16>, vector<2x128xf32> -> vector<2x128xf32>
    %c0_68 = arith.constant 0 : index
    %c0_69 = arith.constant 0 : index
    %119 = vector.load %arg21[%c0_68, %c0_69] : memref<1x128xf32, #tpu.memory_space<vmem>>, vector<1x128xf32>
    %120 = vector.broadcast %119 : vector<1x128xf32> to vector<2x128xf32>
    %121 = arith.addf %118, %120 : vector<2x128xf32>
    %122 = arith.mulf %121, %121 : vector<2x128xf32>
    %cst_70 = arith.constant dense<0.000000e+00> : vector<2xf32>
    %123 = vector.multi_reduction <add>, %122, %cst_70 [1] : vector<2x128xf32> to vector<2xf32>
    %124 = vector.shape_cast %123 : vector<2xf32> to vector<2x1xf32>
    %cst_71 = arith.constant 1.000000e-24 : f32
    %125 = vector.broadcast %cst_71 : f32 to vector<2x1xf32>
    %126 = arith.maximumf %124, %125 : vector<2x1xf32>
    %127 = math.rsqrt %126 : vector<2x1xf32>
    %cst_72 = arith.constant 5.000000e-01 : f32
    %128 = vector.broadcast %cst_72 : f32 to vector<2x1xf32>
    %129 = arith.mulf %128, %126 : vector<2x1xf32>
    %130 = arith.mulf %129, %127 : vector<2x1xf32>
    %131 = arith.mulf %130, %127 : vector<2x1xf32>
    %cst_73 = arith.constant 1.500000e+00 : f32
    %132 = vector.broadcast %cst_73 : f32 to vector<2x1xf32>
    %133 = arith.subf %132, %131 : vector<2x1xf32>
    %134 = arith.mulf %127, %133 : vector<2x1xf32>
    %135 = vector.broadcast %134 : vector<2x1xf32> to vector<2x128xf32>
    %136 = arith.mulf %121, %135 : vector<2x128xf32>
    %c0_74 = arith.constant 0 : index
    %c0_75 = arith.constant 0 : index
    %137 = vector.load %arg23[%c0_74, %c0_75] : memref<2x128xf32, #tpu.memory_space<vmem>>, vector<2x128xf32>
    tpu.vector_store %arg23[%c0_74, %c0_75], %136 {strides = array<i32>} : memref<2x128xf32, #tpu.memory_space<vmem>>, vector<2x128xf32>,
    return
  }
  func.func @transform_0(%arg0: i32) -> (i32, i32) {
    %c0_i32 = arith.constant 0 : i32
    %c0_i32_0 = arith.constant 0 : i32
    %c0_i32_1 = arith.constant 0 : i32
    return %c0_i32, %c0_i32_0 : i32, i32
  }
  func.func @transform_1(%arg0: i32) -> (i32, i32) {
    %c0_i32 = arith.constant 0 : i32
    %c0_i32_0 = arith.constant 0 : i32
    %c0_i32_1 = arith.constant 0 : i32
    return %c0_i32, %c0_i32_0 : i32, i32
  }
  func.func @transform_2(%arg0: i32) -> (i32, i32) {
    %c0_i32 = arith.constant 0 : i32
    %c0_i32_0 = arith.constant 0 : i32
    %c0_i32_1 = arith.constant 0 : i32
    return %c0_i32, %c0_i32_0 : i32, i32
  }
  func.func @transform_3(%arg0: i32) -> (i32, i32) {
    %c0_i32 = arith.constant 0 : i32
    %c0_i32_0 = arith.constant 0 : i32
    %c0_i32_1 = arith.constant 0 : i32
    return %c0_i32, %c0_i32_0 : i32, i32
  }
  func.func @transform_4(%arg0: i32) -> (i32, i32) {
    %c0_i32 = arith.constant 0 : i32
    %c0_i32_0 = arith.constant 0 : i32
    %c0_i32_1 = arith.constant 0 : i32
    return %c0_i32, %c0_i32_0 : i32, i32
  }
  func.func @transform_5(%arg0: i32) -> (i32, i32) {
    %c0_i32 = arith.constant 0 : i32
    %c0_i32_0 = arith.constant 0 : i32
    %c0_i32_1 = arith.constant 0 : i32
    return %c0_i32, %c0_i32_0 : i32, i32
  }
  func.func @transform_6(%arg0: i32) -> (i32, i32) {
    %c0_i32 = arith.constant 0 : i32
    %c0_i32_0 = arith.constant 0 : i32
    %c0_i32_1 = arith.constant 0 : i32
    return %c0_i32, %c0_i32_0 : i32, i32
  }
  func.func @transform_7(%arg0: i32) -> (i32, i32) {
    %c0_i32 = arith.constant 0 : i32
    %c0_i32_0 = arith.constant 0 : i32
    %c0_i32_1 = arith.constant 0 : i32
    return %c0_i32, %c0_i32_0 : i32, i32
  }
  func.func @transform_8(%arg0: i32) -> (i32, i32) {
    %c0_i32 = arith.constant 0 : i32
    %c0_i32_0 = arith.constant 0 : i32
    %c0_i32_1 = arith.constant 0 : i32
    return %c0_i32, %c0_i32_0 : i32, i32
  }
  func.func @transform_9(%arg0: i32) -> (i32, i32) {
    %c0_i32 = arith.constant 0 : i32
    %c0_i32_0 = arith.constant 0 : i32
    %c0_i32_1 = arith.constant 0 : i32
    return %c0_i32, %c0_i32_0 : i32, i32
  }
  func.func @transform_10(%arg0: i32) -> (i32, i32) {
    %c0_i32 = arith.constant 0 : i32
    %c0_i32_0 = arith.constant 0 : i32
    %c0_i32_1 = arith.constant 0 : i32
    return %c0_i32, %c0_i32_0 : i32, i32
  }
  func.func @transform_11(%arg0: i32) -> (i32, i32) {
    %c0_i32 = arith.constant 0 : i32
    %c0_i32_0 = arith.constant 0 : i32
    %c0_i32_1 = arith.constant 0 : i32
    return %c0_i32, %c0_i32_0 : i32, i32
  }
  func.func @transform_12(%arg0: i32) -> (i32, i32) {
    %c0_i32 = arith.constant 0 : i32
    %c0_i32_0 = arith.constant 0 : i32
    %c0_i32_1 = arith.constant 0 : i32
    return %c0_i32, %c0_i32_0 : i32, i32
  }
  func.func @transform_13(%arg0: i32) -> (i32, i32) {
    %c0_i32 = arith.constant 0 : i32
    %c0_i32_0 = arith.constant 0 : i32
    %c0_i32_1 = arith.constant 0 : i32
    return %c0_i32, %c0_i32_0 : i32, i32
  }
  func.func @transform_14(%arg0: i32) -> (i32, i32) {
    %c0_i32 = arith.constant 0 : i32
    %c0_i32_0 = arith.constant 0 : i32
    %c0_i32_1 = arith.constant 0 : i32
    return %c0_i32, %c0_i32_0 : i32, i32
  }
  func.func @transform_15(%arg0: i32) -> (i32, i32) {
    %c0_i32 = arith.constant 0 : i32
    %c0_i32_0 = arith.constant 0 : i32
    %c0_i32_1 = arith.constant 0 : i32
    return %c0_i32, %c0_i32_0 : i32, i32
  }
  func.func @transform_16(%arg0: i32) -> (i32, i32) {
    %c0_i32 = arith.constant 0 : i32
    %c0_i32_0 = arith.constant 0 : i32
    %c0_i32_1 = arith.constant 0 : i32
    return %c0_i32, %c0_i32_0 : i32, i32
  }
  func.func @transform_17(%arg0: i32) -> (i32, i32) {
    %c0_i32 = arith.constant 0 : i32
    %c0_i32_0 = arith.constant 0 : i32
    %c0_i32_1 = arith.constant 0 : i32
    return %c0_i32, %c0_i32_0 : i32, i32
  }
  func.func @transform_18(%arg0: i32) -> (i32, i32) {
    %c0_i32 = arith.constant 0 : i32
    %c0_i32_0 = arith.constant 0 : i32
    %c0_i32_1 = arith.constant 0 : i32
    return %c0_i32, %c0_i32_0 : i32, i32
  }
  func.func @transform_19(%arg0: i32) -> (i32, i32) {
    %c0_i32 = arith.constant 0 : i32
    %c0_i32_0 = arith.constant 0 : i32
    %c0_i32_1 = arith.constant 0 : i32
    return %c0_i32, %c0_i32_0 : i32, i32
  }
  func.func @transform_20(%arg0: i32) -> (i32, i32) {
    %c0_i32 = arith.constant 0 : i32
    %c0_i32_0 = arith.constant 0 : i32
    %c0_i32_1 = arith.constant 0 : i32
    return %c0_i32, %c0_i32_0 : i32, i32
  }
  func.func @transform_21(%arg0: i32) -> (i32, i32) {
    %c0_i32 = arith.constant 0 : i32
    %c0_i32_0 = arith.constant 0 : i32
    %c0_i32_1 = arith.constant 0 : i32
    return %c0_i32, %c0_i32_0 : i32, i32
  }
  func.func @transform_22(%arg0: i32) -> (i32, i32) {
    %c0_i32 = arith.constant 0 : i32
    %c0_i32_0 = arith.constant 0 : i32
    %c0_i32_1 = arith.constant 0 : i32
    return %c0_i32, %c0_i32_0 : i32, i32
  }
}

</mosaic_0001>

<llo_original>
// kernel: _forward_impl.1
$region0: #{_forward_impl.1}
  #allocation0 [shape = 'u32[]', space=smem, size = 0x4, offset = 0x4, fixed_abs, tag = 'smem constant byte address 0x4 - core index']
  #allocation1 [shape = 'u32[144,128]{1,0:T(1,128)}', space=vmem, size = 0x12000, scoped, tag = 'internal scratch']
  %s0 = inlined_call_operand.vmem [shape: bf16[8,192], index: 0, kind: input, shape index: {}]
  %s1 = inlined_call_operand.vmem [shape: bf16[2,8], index: 1, kind: input, shape index: {}]
  %s2 = inlined_call_operand.vmem [shape: bf16[192,128], index: 2, kind: input, shape index: {}]
  %s3 = inlined_call_operand.vmem [shape: f32[1,128], index: 3, kind: input, shape index: {}, may-alias: {3,5,7,9,16,18,20}]
  %s4 = inlined_call_operand.vmem [shape: bf16[128,128], index: 4, kind: input, shape index: {}]
  %s5 = inlined_call_operand.vmem [shape: f32[1,128], index: 5, kind: input, shape index: {}, may-alias: {3,5,7,9,16,18,20}]
  %s6 = inlined_call_operand.vmem [shape: bf16[128,128], index: 6, kind: input, shape index: {}]
  %s7 = inlined_call_operand.vmem [shape: f32[1,128], index: 7, kind: input, shape index: {}, may-alias: {3,5,7,9,16,18,20}]
  %s8 = inlined_call_operand.vmem [shape: bf16[128,128], index: 8, kind: input, shape index: {}]
  %s9 = inlined_call_operand.vmem [shape: f32[1,128], index: 9, kind: input, shape index: {}, may-alias: {3,5,7,9,16,18,20}]
  %s10 = inlined_call_operand.vmem [shape: s32[16,1], index: 10, kind: input, shape index: {}]
  %s11 = inlined_call_operand.vmem [shape: f32[16,1], index: 11, kind: input, shape index: {}]
  %s12 = inlined_call_operand.vmem [shape: f32[2,8], index: 12, kind: input, shape index: {}]
  %s13 = inlined_call_operand.vmem [shape: bf16[2,16], index: 13, kind: input, shape index: {}]
  %s14 = inlined_call_operand.vmem [shape: bf16[64,128], index: 14, kind: input, shape index: {}]
  %s15 = inlined_call_operand.vmem [shape: bf16[128,128], index: 15, kind: input, shape index: {}]
  %s16 = inlined_call_operand.vmem [shape: f32[1,128], index: 16, kind: input, shape index: {}, may-alias: {3,5,7,9,16,18,20}]
  %s17 = inlined_call_operand.vmem [shape: bf16[128,128], index: 17, kind: input, shape index: {}]
  %s18 = inlined_call_operand.vmem [shape: f32[1,128], index: 18, kind: input, shape index: {}, may-alias: {3,5,7,9,16,18,20}]
  %s19 = inlined_call_operand.vmem [shape: bf16[128,128], index: 19, kind: input, shape index: {}]
  %s20 = inlined_call_operand.vmem [shape: f32[1,128], index: 20, kind: input, shape index: {}, may-alias: {3,5,7,9,16,18,20}]
  %s21 = inlined_call_operand.hbm [shape: f32[2,128], index: 21, kind: output, shape index: {0}]
  %s22 = inlined_call_operand.hbm [shape: f32[2,128], index: 22, kind: output, shape index: {1}]
  %23 = xla_tuple %s21, %s22
  %s24 = sld [smem:[#allocation0]]
  $region102: #{_forward_impl.1} parent=0
    _
  %s26 = ssub.s32 1, %s24
  %s27 = scalar_select 0, %s26, %s24
  $region1: #{_forward_impl.1} parent=0
    #allocation2 [shape = 'u8[1024]{0}', space=vmem, size = 0x400, scoped, tag = 'output window, operand 0, single buffered']
    #allocation3 [shape = 's32[1]{0}', space=sflag, size = 0x4, scoped, tag = 'scoped memory for _forward_impl.1']
    #allocation4 [shape = 'u8[1024]{0}', space=vmem, size = 0x400, scoped, tag = 'output window, operand 1, single buffered']
    #allocation5 [shape = 's32[1]{0}', space=sflag, size = 0x4, scoped, tag = 'scoped memory for _forward_impl.1']
    %28 = vsyncpa [#allocation3], 0
    %29 = vsyncpa [#allocation5], 0
    // Predicated region
    $region2: #{_forward_impl.1} parent=1 // pred_check
      _
    $region3: #{_forward_impl.1} parent=1 // pred_check_branch
      %31 = sbr.rel (0) target = $region5
    $region4: #{_forward_impl.1} parent=1 // pred_region
      _
    $region5: #{_forward_impl.1} parent=1 // pred_fallthru
      _
    // Predicated region
    $region6: #{_forward_impl.1} parent=1 // pred_check
      _
    $region7: #{_forward_impl.1} parent=1 // pred_check_branch
      %33 = sbr.rel (0) target = $region9
    $region8: #{_forward_impl.1} parent=1 // pred_region
      _
    $region9: #{_forward_impl.1} parent=1 // pred_fallthru
      _
    // Predicated region
    $region10: #{_forward_impl.1} parent=1 // pred_check
      _
    $region11: #{_forward_impl.1} parent=1 // pred_check_branch
      %35 = sbr.rel (0) target = $region13
    $region12: #{_forward_impl.1} parent=1 // pred_region
      _
    $region13: #{_forward_impl.1} parent=1 // pred_fallthru
      _
    // Predicated region
    $region14: #{_forward_impl.1} parent=1 // pred_check
      _
    $region15: #{_forward_impl.1} parent=1 // pred_check_branch
      %37 = sbr.rel (0) target = $region17
    $region16: #{_forward_impl.1} parent=1 // pred_region
      _
    $region17: #{_forward_impl.1} parent=1 // pred_fallthru
      _
    // Predicated region
    $region18: #{_forward_impl.1} parent=1 // pred_check
      _
    $region19: #{_forward_impl.1} parent=1 // pred_check_branch
      %39 = sbr.rel (0) target = $region21
    $region20: #{_forward_impl.1} parent=1 // pred_region
      _
    $region21: #{_forward_impl.1} parent=1 // pred_fallthru
      _
    // Predicated region
    $region22: #{_forward_impl.1} parent=1 // pred_check
      _
    $region23: #{_forward_impl.1} parent=1 // pred_check_branch
      %41 = sbr.rel (0) target = $region25
    $region24: #{_forward_impl.1} parent=1 // pred_region
      _
    $region25: #{_forward_impl.1} parent=1 // pred_fallthru
      _
    // Predicated region
    $region26: #{_forward_impl.1} parent=1 // pred_check
      _
    $region27: #{_forward_impl.1} parent=1 // pred_check_branch
      %43 = sbr.rel (0) target = $region29
    $region28: #{_forward_impl.1} parent=1 // pred_region
      _
    $region29: #{_forward_impl.1} parent=1 // pred_fallthru
      _
    // Predicated region
    $region30: #{_forward_impl.1} parent=1 // pred_check
      _
    $region31: #{_forward_impl.1} parent=1 // pred_check_branch
      %45 = sbr.rel (0) target = $region33
    $region32: #{_forward_impl.1} parent=1 // pred_region
      _
    $region33: #{_forward_impl.1} parent=1 // pred_fallthru
      _
    // Predicated region
    $region34: #{_forward_impl.1} parent=1 // pred_check
      _
    $region35: #{_forward_impl.1} parent=1 // pred_check_branch
      %47 = sbr.rel (0) target = $region37
    $region36: #{_forward_impl.1} parent=1 // pred_region
      _
    $region37: #{_forward_impl.1} parent=1 // pred_fallthru
      _
    // Predicated region
    $region38: #{_forward_impl.1} parent=1 // pred_check
      _
    $region39: #{_forward_impl.1} parent=1 // pred_check_branch
      %49 = sbr.rel (0) target = $region41
    $region40: #{_forward_impl.1} parent=1 // pred_region
      _
    $region41: #{_forward_impl.1} parent=1 // pred_fallthru
      _
    // Predicated region
    $region42: #{_forward_impl.1} parent=1 // pred_check
      _
    $region43: #{_forward_impl.1} parent=1 // pred_check_branch
      %51 = sbr.rel (0) target = $region45
    $region44: #{_forward_impl.1} parent=1 // pred_region
      _
    $region45: #{_forward_impl.1} parent=1 // pred_fallthru
      _
    // Predicated region
    $region46: #{_forward_impl.1} parent=1 // pred_check
      _
    $region47: #{_forward_impl.1} parent=1 // pred_check_branch
      %53 = sbr.rel (0) target = $region49
    $region48: #{_forward_impl.1} parent=1 // pred_region
      _
    $region49: #{_forward_impl.1} parent=1 // pred_fallthru
      _
    // Predicated region
    $region50: #{_forward_impl.1} parent=1 // pred_check
      _
    $region51: #{_forward_impl.1} parent=1 // pred_check_branch
      %55 = sbr.rel (0) target = $region53
    $region52: #{_forward_impl.1} parent=1 // pred_region
      _
    $region53: #{_forward_impl.1} parent=1 // pred_fallthru
      _
    // Predicated region
    $region54: #{_forward_impl.1} parent=1 // pred_check
      _
    $region55: #{_forward_impl.1} parent=1 // pred_check_branch
      %57 = sbr.rel (0) target = $region57
    $region56: #{_forward_impl.1} parent=1 // pred_region
      _
    $region57: #{_forward_impl.1} parent=1 // pred_fallthru
      _
    // Predicated region
    $region58: #{_forward_impl.1} parent=1 // pred_check
      _
    $region59: #{_forward_impl.1} parent=1 // pred_check_branch
      %59 = sbr.rel (0) target = $region61
    $region60: #{_forward_impl.1} parent=1 // pred_region
      _
    $region61: #{_forward_impl.1} parent=1 // pred_fallthru
      _
    // Predicated region
    $region62: #{_forward_impl.1} parent=1 // pred_check
      _
    $region63: #{_forward_impl.1} parent=1 // pred_check_branch
      %61 = sbr.rel (0) target = $region65
    $region64: #{_forward_impl.1} parent=1 // pred_region
      _
    $region65: #{_forward_impl.1} parent=1 // pred_fallthru
      _
    // Predicated region
    $region66: #{_forward_impl.1} parent=1 // pred_check
      _
    $region67: #{_forward_impl.1} parent=1 // pred_check_branch
      %63 = sbr.rel (0) target = $region69
    $region68: #{_forward_impl.1} parent=1 // pred_region
      _
    $region69: #{_forward_impl.1} parent=1 // pred_fallthru
      _
    // Predicated region
    $region70: #{_forward_impl.1} parent=1 // pred_check
      _
    $region71: #{_forward_impl.1} parent=1 // pred_check_branch
      %65 = sbr.rel (0) target = $region73
    $region72: #{_forward_impl.1} parent=1 // pred_region
      _
    $region73: #{_forward_impl.1} parent=1 // pred_fallthru
      _
    // Predicated region
    $region74: #{_forward_impl.1} parent=1 // pred_check
      _
    $region75: #{_forward_impl.1} parent=1 // pred_check_branch
      %67 = sbr.rel (0) target = $region77
    $region76: #{_forward_impl.1} parent=1 // pred_region
      _
    $region77: #{_forward_impl.1} parent=1 // pred_fallthru
      _
    // Predicated region
    $region78: #{_forward_impl.1} parent=1 // pred_check
      _
    $region79: #{_forward_impl.1} parent=1 // pred_check_branch
      %69 = sbr.rel (0) target = $region81
    $region80: #{_forward_impl.1} parent=1 // pred_region
      _
    $region81: #{_forward_impl.1} parent=1 // pred_fallthru
      _
    // Predicated region
    $region82: #{_forward_impl.1} parent=1 // pred_check
      _
    $region83: #{_forward_impl.1} parent=1 // pred_check_branch
      %71 = sbr.rel (0) target = $region85
    $region84: #{_forward_impl.1} parent=1 // pred_region
      _
    $region85: #{_forward_impl.1} parent=1 // pred_fallthru
      _
    %v73 = vld [vmem:[%s0] sm:$0xff]
    %v74 = vld [vmem:[%s2] sm:$0xf]
    %v75 = vld [vmem:[%s2 + $0x4] sm:$0xf]
    %v76 = vld [vmem:[%s2 + $0x8] sm:$0xf]
    %v77 = vld [vmem:[%s2 + $0xc] sm:$0xf]
    %v78 = vld [vmem:[%s2 + $0x10] sm:$0xf]
    %v79 = vld [vmem:[%s2 + $0x14] sm:$0xf]
    %v80 = vld [vmem:[%s2 + $0x18] sm:$0xf]
    %v81 = vld [vmem:[%s2 + $0x1c] sm:$0xf]
    %v82 = vld [vmem:[%s2 + $0x20] sm:$0xf]
    %v83 = vld [vmem:[%s2 + $0x24] sm:$0xf]
    %v84 = vld [vmem:[%s2 + $0x28] sm:$0xf]
    %v85 = vld [vmem:[%s2 + $0x2c] sm:$0xf]
    %v86 = vld [vmem:[%s2 + $0x30] sm:$0xf]
    %v87 = vld [vmem:[%s2 + $0x34] sm:$0xf]
    %v88 = vld [vmem:[%s2 + $0x38] sm:$0xf]
    %v89 = vld [vmem:[%s2 + $0x3c] sm:$0xf]
    %v90 = vld [vmem:[%s2 + $0x40] sm:$0xf]
    %v91 = vld [vmem:[%s2 + $0x44] sm:$0xf]
    %v92 = vld [vmem:[%s2 + $0x48] sm:$0xf]
    %v93 = vld [vmem:[%s2 + $0x4c] sm:$0xf]
    %v94 = vld [vmem:[%s2 + $0x50] sm:$0xf]
    %v95 = vld [vmem:[%s2 + $0x54] sm:$0xf]
    %v96 = vld [vmem:[%s2 + $0x58] sm:$0xf]
    %v97 = vld [vmem:[%s2 + $0x5c] sm:$0xf]
    %v98 = vld [vmem:[%s3] sm:$0x1]
    %v100 = vlaneseq
    %v101 = vshrl.u32 %v100, 7
    %v102 = vsub.s32 0, %v101
    %v103 = vrot.slane %v98, %v102
    %v106 = vunpack.c.l.b16 %v73
    %v107 = vunpack.c.h.b16 %v73
    %v108 = vpack.c.b16 %v106, %v106
    %v109 = vpack.c.b16 %v107, %v107
    %v135 = vunpack.c.l.b16 %v74
    %v136 = vunpack.c.l.b16 %v75
    %v137 = vunpack.c.l.b16 %v76
    %v138 = vunpack.c.l.b16 %v77
    %v139 = vunpack.c.l.b16 %v78
    %v140 = vunpack.c.l.b16 %v79
    %v141 = vunpack.c.l.b16 %v80
    %v142 = vunpack.c.l.b16 %v81
    %v143 = vunpack.c.l.b16 %v82
    %v144 = vunpack.c.l.b16 %v83
    %v145 = vunpack.c.l.b16 %v84
    %v146 = vunpack.c.l.b16 %v85
    %v147 = vunpack.c.l.b16 %v86
    %v148 = vunpack.c.l.b16 %v87
    %v149 = vunpack.c.l.b16 %v88
    %v150 = vunpack.c.l.b16 %v89
    %v151 = vunpack.c.l.b16 %v90
    %v152 = vunpack.c.l.b16 %v91
    %v153 = vunpack.c.l.b16 %v92
    %v154 = vunpack.c.l.b16 %v93
    %v155 = vunpack.c.l.b16 %v94
    %v156 = vunpack.c.l.b16 %v95
    %v157 = vunpack.c.l.b16 %v96
    %v158 = vunpack.c.l.b16 %v97
    %v159 = vpack.c.b16 %v136, %v135
    %v160 = vpack.c.b16 %v138, %v137
    %v161 = vpack.c.b16 %v140, %v139
    %v162 = vpack.c.b16 %v142, %v141
    %v163 = vpack.c.b16 %v144, %v143
    %v164 = vpack.c.b16 %v146, %v145
    %v165 = vpack.c.b16 %v148, %v147
    %v166 = vpack.c.b16 %v150, %v149
    %v167 = vpack.c.b16 %v152, %v151
    %v168 = vpack.c.b16 %v154, %v153
    %v169 = vpack.c.b16 %v156, %v155
    %v170 = vpack.c.b16 %v158, %v157
    %vm183 = vcmask 523264
    %v185 = vsel %vm183, %v109, 0
    %187 = vmatprep.subr.bf16.mxu0 0
    %188 = vmatpush1.bf16.msra.mxu0 %v166
    %189 = vmatprep.subr.bf16.mxu0 0
    %190 = vmatpush1.bf16.msra.mxu0 %v165
    %191 = vmatprep.subr.bf16.mxu0 0
    %192 = vmatpush1.bf16.msra.mxu0 %v164
    %193 = vmatprep.subr.bf16.mxu0 0
    %194 = vmatpush1.bf16.msra.mxu0 %v163
    %195 = vmatprep.subr.bf16.mxu0 0
    %196 = vmatpush1.bf16.msra.mxu0 %v162
    %197 = vmatprep.subr.bf16.mxu0 0
    %198 = vmatpush1.bf16.msra.mxu0 %v161
    %199 = vmatprep.subr.bf16.mxu0 0
    %200 = vmatpush1.bf16.msra.mxu0 %v160
    %201 = vmatprep.subr.bf16.mxu0 0
    %202 = vmatpush1.bf16.msra.mxu0 %v159
    %203 = vmatprep.subr.bf16.mxu0 0
    %204 = vmatpush2.bf16.msra.mxu0 0
    %205 = vmatprep.subr.bf16.mxu0 0
    %206 = vmatpush2.bf16.msra.mxu0 0
    %207 = vmatprep.subr.bf16.mxu0 0
    %208 = vmatpush2.bf16.msra.mxu0 0
    %209 = vmatprep.subr.bf16.mxu0 0
    %210 = vmatpush2.bf16.msra.mxu0 0
    %211 = vmatprep.subr.bf16.mxu0 0
    %212 = vmatpush2.bf16.msra.mxu0 %v170
    %213 = vmatprep.subr.bf16.mxu0 0
    %214 = vmatpush2.bf16.msra.mxu0 %v169
    %215 = vmatprep.subr.bf16.mxu0 0
    %216 = vmatpush2.bf16.msra.mxu0 %v168
    %217 = vmatprep.subr.bf16.mxu0 0
    %218 = vmatpush2.bf16.msra.mxu0 %v167
    %219 = vmatprep.mubr.bf16.mxu0 %v185
    %220 = vmatmul.mubr.bf16.gmra.mxu0 %v108
    %v221 = vpop.f32.mrf.mxu0
    %v222 = vadd.f32 %v103, %v221
    %v223 = vpop.f32.mrf.mxu0
    %v224 = vpop.f32.mrf.mxu0
    %v225 = vpop.f32.mrf.mxu0
    %226 = vdwg.mxu0
    %v227 = vmul.f32 %v222, %v222
    %v228 = vmul.f32 %v222, %v227
    %v229 = vmul.f32 %v228, 0.044715
    %v230 = vadd.f32 %v222, %v229
    %v231 = vmul.f32 %v230, 0.7978846
    %v232 = vtanh.pop %v231
    %v233 = vadd.f32 %v232, 1.0
    %v234 = vmul.f32 %v233, 0.5
    %v235 = vmul.f32 %v222, %v234
    %v236 = vpack.c.bf16 %v235, %v235
    %v237 = vld [vmem:[%s4] sm:$0xf]
    %v238 = vld [vmem:[%s4 + $0x4] sm:$0xf]
    %v239 = vld [vmem:[%s4 + $0x8] sm:$0xf]
    %v240 = vld [vmem:[%s4 + $0xc] sm:$0xf]
    %v241 = vld [vmem:[%s4 + $0x10] sm:$0xf]
    %v242 = vld [vmem:[%s4 + $0x14] sm:$0xf]
    %v243 = vld [vmem:[%s4 + $0x18] sm:$0xf]
    %v244 = vld [vmem:[%s4 + $0x1c] sm:$0xf]
    %v245 = vld [vmem:[%s4 + $0x20] sm:$0xf]
    %v246 = vld [vmem:[%s4 + $0x24] sm:$0xf]
    %v247 = vld [vmem:[%s4 + $0x28] sm:$0xf]
    %v248 = vld [vmem:[%s4 + $0x2c] sm:$0xf]
    %v249 = vld [vmem:[%s4 + $0x30] sm:$0xf]
    %v250 = vld [vmem:[%s4 + $0x34] sm:$0xf]
    %v251 = vld [vmem:[%s4 + $0x38] sm:$0xf]
    %v252 = vld [vmem:[%s4 + $0x3c] sm:$0xf]
    %v269 = vunpack.c.l.b16 %v237
    %v270 = vunpack.c.l.b16 %v238
    %v271 = vunpack.c.l.b16 %v239
    %v272 = vunpack.c.l.b16 %v240
    %v273 = vunpack.c.l.b16 %v241
    %v274 = vunpack.c.l.b16 %v242
    %v275 = vunpack.c.l.b16 %v243
    %v276 = vunpack.c.l.b16 %v244
    %v277 = vunpack.c.l.b16 %v245
    %v278 = vunpack.c.l.b16 %v246
    %v279 = vunpack.c.l.b16 %v247
    %v280 = vunpack.c.l.b16 %v248
    %v281 = vunpack.c.l.b16 %v249
    %v282 = vunpack.c.l.b16 %v250
    %v283 = vunpack.c.l.b16 %v251
    %v284 = vunpack.c.l.b16 %v252
    %v285 = vpack.c.b16 %v270, %v269
    %v286 = vpack.c.b16 %v272, %v271
    %v287 = vpack.c.b16 %v274, %v273
    %v288 = vpack.c.b16 %v276, %v275
    %v289 = vpack.c.b16 %v278, %v277
    %v290 = vpack.c.b16 %v280, %v279
    %v291 = vpack.c.b16 %v282, %v281
    %v292 = vpack.c.b16 %v284, %v283
    %301 = vmatprep.subr.bf16.mxu0 0
    %302 = vmatpush1.bf16.msra.mxu0 %v292
    %303 = vmatprep.subr.bf16.mxu0 0
    %304 = vmatpush1.bf16.msra.mxu0 %v291
    %305 = vmatprep.subr.bf16.mxu0 0
    %306 = vmatpush1.bf16.msra.mxu0 %v290
    %307 = vmatprep.subr.bf16.mxu0 0
    %308 = vmatpush1.bf16.msra.mxu0 %v289
    %309 = vmatprep.subr.bf16.mxu0 0
    %310 = vmatpush1.bf16.msra.mxu0 %v288
    %311 = vmatprep.subr.bf16.mxu0 0
    %312 = vmatpush1.bf16.msra.mxu0 %v287
    %313 = vmatprep.subr.bf16.mxu0 0
    %314 = vmatpush1.bf16.msra.mxu0 %v286
    %315 = vmatprep.subr.bf16.mxu0 0
    %316 = vmatpush1.bf16.msra.mxu0 %v285
    %317 = vmatprep.subr.bf16.mxu0 0
    %318 = vmatpush2.bf16.msra.mxu0 0
    %319 = vmatprep.subr.bf16.mxu0 0
    %320 = vmatpush2.bf16.msra.mxu0 0
    %321 = vmatprep.subr.bf16.mxu0 0
    %322 = vmatpush2.bf16.msra.mxu0 0
    %323 = vmatprep.subr.bf16.mxu0 0
    %324 = vmatpush2.bf16.msra.mxu0 0
    %325 = vmatprep.subr.bf16.mxu0 0
    %326 = vmatpush2.bf16.msra.mxu0 0
    %327 = vmatprep.subr.bf16.mxu0 0
    %328 = vmatpush2.bf16.msra.mxu0 0
    %329 = vmatprep.subr.bf16.mxu0 0
    %330 = vmatpush2.bf16.msra.mxu0 0
    %331 = vmatprep.subr.bf16.mxu0 0
    %332 = vmatpush2.bf16.msra.mxu0 0
    %333 = vmatprep.mubr.bf16.mxu0 0
    %334 = vmatmul.mubr.bf16.gmra.mxu0 %v236
    %v335 = vpop.f32.mrf.mxu0
    %v336 = vadd.f32 0.0, %v335
    %v337 = vpop.f32.mrf.mxu0
    %v338 = vpop.f32.mrf.mxu0
    %v339 = vpop.f32.mrf.mxu0
    %340 = vdwg.mxu0
    %v341 = vld [vmem:[%s1] sm:$0x1]
    %v342 = vpack.c.bf16 %v336, %v336
    %v343 = vld [vmem:[%s5] sm:$0x1]
    %v345 = vlaneseq
    %v346 = vshrl.u32 %v345, 7
    %v347 = vsub.s32 0, %v346
    %v348 = vrot.slane %v343, %v347
    %vm350 = vcmask 64512
    %v352 = vsel %vm350, %v341, 0
    %vm354 = vcmask 1043456
    %v356 = vsel %vm354, %v342, 0
    %358 = vmatprep.subr.bf16.mxu0 0
    %359 = vmatpush1.bf16.msra.mxu0 0
    %360 = vmatprep.subr.bf16.mxu0 0
    %361 = vmatpush1.bf16.msra.mxu0 0
    %362 = vmatprep.subr.bf16.mxu0 0
    %363 = vmatpush1.bf16.msra.mxu0 0
    %364 = vmatprep.subr.bf16.mxu0 0
    %365 = vmatpush1.bf16.msra.mxu0 0
    %366 = vmatprep.subr.bf16.mxu0 0
    %367 = vmatpush1.bf16.msra.mxu0 0
    %368 = vmatprep.subr.bf16.mxu0 0
    %369 = vmatpush1.bf16.msra.mxu0 0
    %370 = vmatprep.subr.bf16.mxu0 0
    %371 = vmatpush1.bf16.msra.mxu0 0
    %372 = vmatprep.subr.bf16.mxu0 0
    %373 = vmatpush1.bf16.msra.mxu0 %v356
    %374 = vmatprep.subr.bf16.mxu0 0
    %375 = vmatpush2.bf16.msra.mxu0 0
    %376 = vmatprep.subr.bf16.mxu0 0
    %377 = vmatpush2.bf16.msra.mxu0 0
    %378 = vmatprep.subr.bf16.mxu0 0
    %379 = vmatpush2.bf16.msra.mxu0 0
    %380 = vmatprep.subr.bf16.mxu0 0
    %381 = vmatpush2.bf16.msra.mxu0 0
    %382 = vmatprep.subr.bf16.mxu0 0
    %383 = vmatpush2.bf16.msra.mxu0 0
    %384 = vmatprep.subr.bf16.mxu0 0
    %385 = vmatpush2.bf16.msra.mxu0 0
    %386 = vmatprep.subr.bf16.mxu0 0
    %387 = vmatpush2.bf16.msra.mxu0 0
    %388 = vmatprep.subr.bf16.mxu0 0
    %389 = vmatpush2.bf16.msra.mxu0 0
    %390 = vmatprep.mubr.bf16.mxu0 0
    %391 = vmatmul.mubr.bf16.gmra.mxu0 %v352
    %v392 = vpop.f32.mrf.mxu0
    %v393 = vadd.f32 %v348, %v392
    %v394 = vpop.f32.mrf.mxu0
    %v395 = vpop.f32.mrf.mxu0
    %v396 = vpop.f32.mrf.mxu0
    %397 = vdwg.mxu0
    %v398 = vpack.c.bf16 %v393, %v393
    %v399 = vld [vmem:[%s6] sm:$0xf]
    %v400 = vld [vmem:[%s6 + $0x4] sm:$0xf]
    %v401 = vld [vmem:[%s6 + $0x8] sm:$0xf]
    %v402 = vld [vmem:[%s6 + $0xc] sm:$0xf]
    %v403 = vld [vmem:[%s6 + $0x10] sm:$0xf]
    %v404 = vld [vmem:[%s6 + $0x14] sm:$0xf]
    %v405 = vld [vmem:[%s6 + $0x18] sm:$0xf]
    %v406 = vld [vmem:[%s6 + $0x1c] sm:$0xf]
    %v407 = vld [vmem:[%s6 + $0x20] sm:$0xf]
    %v408 = vld [vmem:[%s6 + $0x24] sm:$0xf]
    %v409 = vld [vmem:[%s6 + $0x28] sm:$0xf]
    %v410 = vld [vmem:[%s6 + $0x2c] sm:$0xf]
    %v411 = vld [vmem:[%s6 + $0x30] sm:$0xf]
    %v412 = vld [vmem:[%s6 + $0x34] sm:$0xf]
    %v413 = vld [vmem:[%s6 + $0x38] sm:$0xf]
    %v414 = vld [vmem:[%s6 + $0x3c] sm:$0xf]
    %v415 = vld [vmem:[%s7] sm:$0x1]
    %v417 = vlaneseq
    %v418 = vshrl.u32 %v417, 7
    %v419 = vsub.s32 0, %v418
    %v420 = vrot.slane %v415, %v419
    %v438 = vunpack.c.l.b16 %v399
    %v439 = vunpack.c.l.b16 %v400
    %v440 = vunpack.c.l.b16 %v401
    %v441 = vunpack.c.l.b16 %v402
    %v442 = vunpack.c.l.b16 %v403
    %v443 = vunpack.c.l.b16 %v404
    %v444 = vunpack.c.l.b16 %v405
    %v445 = vunpack.c.l.b16 %v406
    %v446 = vunpack.c.l.b16 %v407
    %v447 = vunpack.c.l.b16 %v408
    %v448 = vunpack.c.l.b16 %v409
    %v449 = vunpack.c.l.b16 %v410
    %v450 = vunpack.c.l.b16 %v411
    %v451 = vunpack.c.l.b16 %v412
    %v452 = vunpack.c.l.b16 %v413
    %v453 = vunpack.c.l.b16 %v414
    %v454 = vpack.c.b16 %v439, %v438
    %v455 = vpack.c.b16 %v441, %v440
    %v456 = vpack.c.b16 %v443, %v442
    %v457 = vpack.c.b16 %v445, %v444
    %v458 = vpack.c.b16 %v447, %v446
    %v459 = vpack.c.b16 %v449, %v448
    %v460 = vpack.c.b16 %v451, %v450
    %v461 = vpack.c.b16 %v453, %v452
    %470 = vmatprep.subr.bf16.mxu0 0
    %471 = vmatpush1.bf16.msra.mxu0 %v461
    %472 = vmatprep.subr.bf16.mxu0 0
    %473 = vmatpush1.bf16.msra.mxu0 %v460
    %474 = vmatprep.subr.bf16.mxu0 0
    %475 = vmatpush1.bf16.msra.mxu0 %v459
    %476 = vmatprep.subr.bf16.mxu0 0
    %477 = vmatpush1.bf16.msra.mxu0 %v458
    %478 = vmatprep.subr.bf16.mxu0 0
    %479 = vmatpush1.bf16.msra.mxu0 %v457
    %480 = vmatprep.subr.bf16.mxu0 0
    %481 = vmatpush1.bf16.msra.mxu0 %v456
    %482 = vmatprep.subr.bf16.mxu0 0
    %483 = vmatpush1.bf16.msra.mxu0 %v455
    %484 = vmatprep.subr.bf16.mxu0 0
    %485 = vmatpush1.bf16.msra.mxu0 %v454
    %486 = vmatprep.subr.bf16.mxu0 0
    %487 = vmatpush2.bf16.msra.mxu0 0
    %488 = vmatprep.subr.bf16.mxu0 0
    %489 = vmatpush2.bf16.msra.mxu0 0
    %490 = vmatprep.subr.bf16.mxu0 0
    %491 = vmatpush2.bf16.msra.mxu0 0
    %492 = vmatprep.subr.bf16.mxu0 0
    %493 = vmatpush2.bf16.msra.mxu0 0
    %494 = vmatprep.subr.bf16.mxu0 0
    %495 = vmatpush2.bf16.msra.mxu0 0
    %496 = vmatprep.subr.bf16.mxu0 0
    %497 = vmatpush2.bf16.msra.mxu0 0
    %498 = vmatprep.subr.bf16.mxu0 0
    %499 = vmatpush2.bf16.msra.mxu0 0
    %500 = vmatprep.subr.bf16.mxu0 0
    %501 = vmatpush2.bf16.msra.mxu0 0
    %502 = vmatprep.mubr.bf16.mxu0 0
    %503 = vmatmul.mubr.bf16.gmra.mxu0 %v398
    %v504 = vpop.f32.mrf.mxu0
    %v505 = vadd.f32 %v420, %v504
    %v506 = vpop.f32.mrf.mxu0
    %v507 = vpop.f32.mrf.mxu0
    %v508 = vpop.f32.mrf.mxu0
    %509 = vdwg.mxu0
    %v510 = vmul.f32 %v505, %v505
    %v511 = vmul.f32 %v505, %v510
    %v512 = vmul.f32 %v511, 0.044715
    %v513 = vadd.f32 %v505, %v512
    %v514 = vmul.f32 %v513, 0.7978846
    %v515 = vtanh.pop %v514
    %v516 = vadd.f32 %v515, 1.0
    %v517 = vmul.f32 %v516, 0.5
    %v518 = vmul.f32 %v505, %v517
    %v519 = vpack.c.bf16 %v518, %v518
    %v520 = vld [vmem:[%s8] sm:$0xf]
    %v521 = vld [vmem:[%s8 + $0x4] sm:$0xf]
    %v522 = vld [vmem:[%s8 + $0x8] sm:$0xf]
    %v523 = vld [vmem:[%s8 + $0xc] sm:$0xf]
    %v524 = vld [vmem:[%s8 + $0x10] sm:$0xf]
    %v525 = vld [vmem:[%s8 + $0x14] sm:$0xf]
    %v526 = vld [vmem:[%s8 + $0x18] sm:$0xf]
    %v527 = vld [vmem:[%s8 + $0x1c] sm:$0xf]
    %v528 = vld [vmem:[%s8 + $0x20] sm:$0xf]
    %v529 = vld [vmem:[%s8 + $0x24] sm:$0xf]
    %v530 = vld [vmem:[%s8 + $0x28] sm:$0xf]
    %v531 = vld [vmem:[%s8 + $0x2c] sm:$0xf]
    %v532 = vld [vmem:[%s8 + $0x30] sm:$0xf]
    %v533 = vld [vmem:[%s8 + $0x34] sm:$0xf]
    %v534 = vld [vmem:[%s8 + $0x38] sm:$0xf]
    %v535 = vld [vmem:[%s8 + $0x3c] sm:$0xf]
    %v536 = vld [vmem:[%s9] sm:$0x1]
    %v538 = vlaneseq
    %v539 = vshrl.u32 %v538, 7
    %v540 = vsub.s32 0, %v539
    %v541 = vrot.slane %v536, %v540
    %v559 = vunpack.c.l.b16 %v520
    %v560 = vunpack.c.l.b16 %v521
    %v561 = vunpack.c.l.b16 %v522
    %v562 = vunpack.c.l.b16 %v523
    %v563 = vunpack.c.l.b16 %v524
    %v564 = vunpack.c.l.b16 %v525
    %v565 = vunpack.c.l.b16 %v526
    %v566 = vunpack.c.l.b16 %v527
    %v567 = vunpack.c.l.b16 %v528
    %v568 = vunpack.c.l.b16 %v529
    %v569 = vunpack.c.l.b16 %v530
    %v570 = vunpack.c.l.b16 %v531
    %v571 = vunpack.c.l.b16 %v532
    %v572 = vunpack.c.l.b16 %v533
    %v573 = vunpack.c.l.b16 %v534
    %v574 = vunpack.c.l.b16 %v535
    %v575 = vpack.c.b16 %v560, %v559
    %v576 = vpack.c.b16 %v562, %v561
    %v577 = vpack.c.b16 %v564, %v563
    %v578 = vpack.c.b16 %v566, %v565
    %v579 = vpack.c.b16 %v568, %v567
    %v580 = vpack.c.b16 %v570, %v569
    %v581 = vpack.c.b16 %v572, %v571
    %v582 = vpack.c.b16 %v574, %v573
    %591 = vmatprep.subr.bf16.mxu0 0
    %592 = vmatpush1.bf16.msra.mxu0 %v582
    %593 = vmatprep.subr.bf16.mxu0 0
    %594 = vmatpush1.bf16.msra.mxu0 %v581
    %595 = vmatprep.subr.bf16.mxu0 0
    %596 = vmatpush1.bf16.msra.mxu0 %v580
    %597 = vmatprep.subr.bf16.mxu0 0
    %598 = vmatpush1.bf16.msra.mxu0 %v579
    %599 = vmatprep.subr.bf16.mxu0 0
    %600 = vmatpush1.bf16.msra.mxu0 %v578
    %601 = vmatprep.subr.bf16.mxu0 0
    %602 = vmatpush1.bf16.msra.mxu0 %v577
    %603 = vmatprep.subr.bf16.mxu0 0
    %604 = vmatpush1.bf16.msra.mxu0 %v576
    %605 = vmatprep.subr.bf16.mxu0 0
    %606 = vmatpush1.bf16.msra.mxu0 %v575
    %607 = vmatprep.subr.bf16.mxu0 0
    %608 = vmatpush2.bf16.msra.mxu0 0
    %609 = vmatprep.subr.bf16.mxu0 0
    %610 = vmatpush2.bf16.msra.mxu0 0
    %611 = vmatprep.subr.bf16.mxu0 0
    %612 = vmatpush2.bf16.msra.mxu0 0
    %613 = vmatprep.subr.bf16.mxu0 0
    %614 = vmatpush2.bf16.msra.mxu0 0
    %615 = vmatprep.subr.bf16.mxu0 0
    %616 = vmatpush2.bf16.msra.mxu0 0
    %617 = vmatprep.subr.bf16.mxu0 0
    %618 = vmatpush2.bf16.msra.mxu0 0
    %619 = vmatprep.subr.bf16.mxu0 0
    %620 = vmatpush2.bf16.msra.mxu0 0
    %621 = vmatprep.subr.bf16.mxu0 0
    %622 = vmatpush2.bf16.msra.mxu0 0
    %623 = vmatprep.mubr.bf16.mxu0 0
    %624 = vmatmul.mubr.bf16.gmra.mxu0 %v519
    %v625 = vpop.f32.mrf.mxu0
    %v626 = vadd.f32 %v541, %v625
    %v627 = vpop.f32.mrf.mxu0
    %v628 = vpop.f32.mrf.mxu0
    %v629 = vpop.f32.mrf.mxu0
    %630 = vdwg.mxu0
    %v631 = vmul.f32 %v626, %v626
    %vm632 = vcmask 1041408
    %v633 = vsel %vm632, %v631, 0.0
    %634 = vadd.xlane.f32.xlu0 %v633
    %v635 = vpop.xlane.xlu0 %634
    %v636 = vmax.f32 %v635, 1e-24
    %v637 = vrsqrt.pop %v636
    %v638 = vmul.f32 %v636, 0.5
    %v639 = vmul.f32 %v638, %v637
    %v640 = vmul.f32 %v639, %v637
    %v641 = vsub.f32 1.5, %v640
    %v642 = vmul.f32 %v637, %v641
    %v643 = vmul.f32 %v626, %v642
    %644 = vst [vmem:[#allocation2] sm:$0x3] %v643
    %v645 = vld [vmem:[%s10] sm:$0xff]
    %v646 = vld [vmem:[%s10 + $0x8] sm:$0xff]
    %v647 = vlaneseq
    %v648 = vand.u32 %v647, 127
    %649 = vset.pattern.permute.xlu0 0
    %650 = vperm.xlu0 %649, %v645
    %v651 = vpop.permute.xlu0 %650
    %652 = vset.pattern.permute.xlu0 0
    %653 = vperm.xlu0 %652, %v646
    %v654 = vpop.permute.xlu0 %653
    %vm655 = vcmp.eq.s32.totalorder %v651, %v648
    %vm656 = vcmp.eq.s32.totalorder %v654, %v648
    %v657 = vsel %vm655, 1, 0
    %v658 = vsel %vm656, 1, 0
    %v659 = vcvt.s32.f32 %v657
    %v660 = vcvt.s32.f32 %v658
    %v661 = vld [vmem:[%s11] sm:$0xff]
    %v662 = vld [vmem:[%s11 + $0x8] sm:$0xff]
    %664 = vset.pattern.permute.xlu0 0
    %665 = vperm.xlu0 %664, %v661
    %v666 = vpop.permute.xlu0 %665
    %669 = vset.pattern.permute.xlu0 0
    %670 = vperm.xlu0 %669, %v662
    %v671 = vpop.permute.xlu0 %670
    %v673 = vmul.f32 %v659, %v666
    %v674 = vmul.f32 %v660, %v671
    %v675 = vpack.c.bf16 %v674, %v673
    %v676 = vld [vmem:[%s14] sm:$0xf]
    %v677 = vld [vmem:[%s14 + $0x4] sm:$0xf]
    %v678 = vld [vmem:[%s14 + $0x8] sm:$0xf]
    %v679 = vld [vmem:[%s14 + $0xc] sm:$0xf]
    %v680 = vld [vmem:[%s14 + $0x10] sm:$0xf]
    %v681 = vld [vmem:[%s14 + $0x14] sm:$0xf]
    %v682 = vld [vmem:[%s14 + $0x18] sm:$0xf]
    %v683 = vld [vmem:[%s14 + $0x1c] sm:$0xf]
    %v692 = vunpack.c.l.b16 %v676
    %v693 = vunpack.c.l.b16 %v677
    %v694 = vunpack.c.l.b16 %v678
    %v695 = vunpack.c.l.b16 %v679
    %v696 = vunpack.c.l.b16 %v680
    %v697 = vunpack.c.l.b16 %v681
    %v698 = vunpack.c.l.b16 %v682
    %v699 = vunpack.c.l.b16 %v683
    %v700 = vpack.c.b16 %v693, %v692
    %v701 = vpack.c.b16 %v695, %v694
    %v702 = vpack.c.b16 %v697, %v696
    %v703 = vpack.c.b16 %v699, %v698
    %v709 = vsel %vm183, %v675, 0
    %711 = vmatprep.subr.bf16.mxu0 0
    %712 = vmatpush1.bf16.msra.mxu0 0
    %713 = vmatprep.subr.bf16.mxu0 0
    %714 = vmatpush1.bf16.msra.mxu0 0
    %715 = vmatprep.subr.bf16.mxu0 0
    %716 = vmatpush1.bf16.msra.mxu0 0
    %717 = vmatprep.subr.bf16.mxu0 0
    %718 = vmatpush1.bf16.msra.mxu0 0
    %719 = vmatprep.subr.bf16.mxu0 0
    %720 = vmatpush1.bf16.msra.mxu0 %v703
    %721 = vmatprep.subr.bf16.mxu0 0
    %722 = vmatpush1.bf16.msra.mxu0 %v702
    %723 = vmatprep.subr.bf16.mxu0 0
    %724 = vmatpush1.bf16.msra.mxu0 %v701
    %725 = vmatprep.subr.bf16.mxu0 0
    %726 = vmatpush1.bf16.msra.mxu0 %v700
    %727 = vmatprep.subr.bf16.mxu0 0
    %728 = vmatpush2.bf16.msra.mxu0 0
    %729 = vmatprep.subr.bf16.mxu0 0
    %730 = vmatpush2.bf16.msra.mxu0 0
    %731 = vmatprep.subr.bf16.mxu0 0
    %732 = vmatpush2.bf16.msra.mxu0 0
    %733 = vmatprep.subr.bf16.mxu0 0
    %734 = vmatpush2.bf16.msra.mxu0 0
    %735 = vmatprep.subr.bf16.mxu0 0
    %736 = vmatpush2.bf16.msra.mxu0 0
    %737 = vmatprep.subr.bf16.mxu0 0
    %738 = vmatpush2.bf16.msra.mxu0 0
    %739 = vmatprep.subr.bf16.mxu0 0
    %740 = vmatpush2.bf16.msra.mxu0 0
    %741 = vmatprep.subr.bf16.mxu0 0
    %742 = vmatpush2.bf16.msra.mxu0 0
    %743 = vmatprep.mubr.bf16.mxu0 0
    %744 = vmatmul.mubr.bf16.gmra.mxu0 %v709
    %v745 = vpop.f32.mrf.mxu0
    %v746 = vadd.f32 0.0, %v745
    %v747 = vpop.f32.mrf.mxu0
    %v748 = vpop.f32.mrf.mxu0
    %v749 = vadd.f32 0.0, %v748
    %v750 = vpop.f32.mrf.mxu0
    %751 = vdwg.mxu0
    %v752 = vpack.c.bf16 %v749, %v746
    %v753 = vld [vmem:[%s15] sm:$0xf]
    %v754 = vld [vmem:[%s15 + $0x4] sm:$0xf]
    %v755 = vld [vmem:[%s15 + $0x8] sm:$0xf]
    %v756 = vld [vmem:[%s15 + $0xc] sm:$0xf]
    %v757 = vld [vmem:[%s15 + $0x10] sm:$0xf]
    %v758 = vld [vmem:[%s15 + $0x14] sm:$0xf]
    %v759 = vld [vmem:[%s15 + $0x18] sm:$0xf]
    %v760 = vld [vmem:[%s15 + $0x1c] sm:$0xf]
    %v761 = vld [vmem:[%s15 + $0x20] sm:$0xf]
    %v762 = vld [vmem:[%s15 + $0x24] sm:$0xf]
    %v763 = vld [vmem:[%s15 + $0x28] sm:$0xf]
    %v764 = vld [vmem:[%s15 + $0x2c] sm:$0xf]
    %v765 = vld [vmem:[%s15 + $0x30] sm:$0xf]
    %v766 = vld [vmem:[%s15 + $0x34] sm:$0xf]
    %v767 = vld [vmem:[%s15 + $0x38] sm:$0xf]
    %v768 = vld [vmem:[%s15 + $0x3c] sm:$0xf]
    %v785 = vunpack.c.l.b16 %v753
    %v786 = vunpack.c.l.b16 %v754
    %v787 = vunpack.c.l.b16 %v755
    %v788 = vunpack.c.l.b16 %v756
    %v789 = vunpack.c.l.b16 %v757
    %v790 = vunpack.c.l.b16 %v758
    %v791 = vunpack.c.l.b16 %v759
    %v792 = vunpack.c.l.b16 %v760
    %v793 = vunpack.c.l.b16 %v761
    %v794 = vunpack.c.l.b16 %v762
    %v795 = vunpack.c.l.b16 %v763
    %v796 = vunpack.c.l.b16 %v764
    %v797 = vunpack.c.l.b16 %v765
    %v798 = vunpack.c.l.b16 %v766
    %v799 = vunpack.c.l.b16 %v767
    %v800 = vunpack.c.l.b16 %v768
    %v801 = vpack.c.b16 %v786, %v785
    %v802 = vpack.c.b16 %v788, %v787
    %v803 = vpack.c.b16 %v790, %v789
    %v804 = vpack.c.b16 %v792, %v791
    %v805 = vpack.c.b16 %v794, %v793
    %v806 = vpack.c.b16 %v796, %v795
    %v807 = vpack.c.b16 %v798, %v797
    %v808 = vpack.c.b16 %v800, %v799
    %817 = vmatprep.subr.bf16.mxu0 0
    %818 = vmatpush1.bf16.msra.mxu0 %v808
    %819 = vmatprep.subr.bf16.mxu0 0
    %820 = vmatpush1.bf16.msra.mxu0 %v807
    %821 = vmatprep.subr.bf16.mxu0 0
    %822 = vmatpush1.bf16.msra.mxu0 %v806
    %823 = vmatprep.subr.bf16.mxu0 0
    %824 = vmatpush1.bf16.msra.mxu0 %v805
    %825 = vmatprep.subr.bf16.mxu0 0
    %826 = vmatpush1.bf16.msra.mxu0 %v804
    %827 = vmatprep.subr.bf16.mxu0 0
    %828 = vmatpush1.bf16.msra.mxu0 %v803
    %829 = vmatprep.subr.bf16.mxu0 0
    %830 = vmatpush1.bf16.msra.mxu0 %v802
    %831 = vmatprep.subr.bf16.mxu0 0
    %832 = vmatpush1.bf16.msra.mxu0 %v801
    %833 = vmatprep.subr.bf16.mxu0 0
    %834 = vmatpush2.bf16.msra.mxu0 0
    %835 = vmatprep.subr.bf16.mxu0 0
    %836 = vmatpush2.bf16.msra.mxu0 0
    %837 = vmatprep.subr.bf16.mxu0 0
    %838 = vmatpush2.bf16.msra.mxu0 0
    %839 = vmatprep.subr.bf16.mxu0 0
    %840 = vmatpush2.bf16.msra.mxu0 0
    %841 = vmatprep.subr.bf16.mxu0 0
    %842 = vmatpush2.bf16.msra.mxu0 0
    %843 = vmatprep.subr.bf16.mxu0 0
    %844 = vmatpush2.bf16.msra.mxu0 0
    %845 = vmatprep.subr.bf16.mxu0 0
    %846 = vmatpush2.bf16.msra.mxu0 0
    %847 = vmatprep.subr.bf16.mxu0 0
    %848 = vmatpush2.bf16.msra.mxu0 0
    %849 = vmatprep.mubr.bf16.mxu0 0
    %850 = vmatmul.mubr.bf16.gmra.mxu0 %v752
    %v851 = vpop.f32.mrf.mxu0
    %v852 = vadd.f32 0.0, %v851
    %v853 = vpop.f32.mrf.mxu0
    %v854 = vpop.f32.mrf.mxu0
    %v855 = vadd.f32 0.0, %v854
    %v856 = vpop.f32.mrf.mxu0
    %857 = vdwg.mxu0
    %v858 = vld [vmem:[%s13] sm:$0x1]
    %v859 = vpack.c.bf16 %v855, %v852
    %vm860 = vcmask 130048
    %v862 = vsel %vm860, %v858, 0
    %864 = vmatprep.subr.bf16.mxu0 0
    %865 = vmatpush1.bf16.msra.mxu0 0
    %866 = vmatprep.subr.bf16.mxu0 0
    %867 = vmatpush1.bf16.msra.mxu0 0
    %868 = vmatprep.subr.bf16.mxu0 0
    %869 = vmatpush1.bf16.msra.mxu0 0
    %870 = vmatprep.subr.bf16.mxu0 0
    %871 = vmatpush1.bf16.msra.mxu0 0
    %872 = vmatprep.subr.bf16.mxu0 0
    %873 = vmatpush1.bf16.msra.mxu0 0
    %874 = vmatprep.subr.bf16.mxu0 0
    %875 = vmatpush1.bf16.msra.mxu0 0
    %876 = vmatprep.subr.bf16.mxu0 0
    %877 = vmatpush1.bf16.msra.mxu0 0
    %878 = vmatprep.subr.bf16.mxu0 0
    %879 = vmatpush1.bf16.msra.mxu0 %v859
    %880 = vmatprep.subr.bf16.mxu0 0
    %881 = vmatpush2.bf16.msra.mxu0 0
    %882 = vmatprep.subr.bf16.mxu0 0
    %883 = vmatpush2.bf16.msra.mxu0 0
    %884 = vmatprep.subr.bf16.mxu0 0
    %885 = vmatpush2.bf16.msra.mxu0 0
    %886 = vmatprep.subr.bf16.mxu0 0
    %887 = vmatpush2.bf16.msra.mxu0 0
    %888 = vmatprep.subr.bf16.mxu0 0
    %889 = vmatpush2.bf16.msra.mxu0 0
    %890 = vmatprep.subr.bf16.mxu0 0
    %891 = vmatpush2.bf16.msra.mxu0 0
    %892 = vmatprep.subr.bf16.mxu0 0
    %893 = vmatpush2.bf16.msra.mxu0 0
    %894 = vmatprep.subr.bf16.mxu0 0
    %895 = vmatpush2.bf16.msra.mxu0 0
    %896 = vmatprep.mubr.bf16.mxu0 0
    %897 = vmatmul.mubr.bf16.gmra.mxu0 %v862
    %v898 = vpop.f32.mrf.mxu0
    %v899 = vadd.f32 0.0, %v898
    %v900 = vpop.f32.mrf.mxu0
    %v901 = vpop.f32.mrf.mxu0
    %v902 = vpop.f32.mrf.mxu0
    %903 = vdwg.mxu0
    %v904 = vld [vmem:[%s12] sm:$0x3]
    %vm905 = vcmask 58368
    %v906 = vsel %vm905, %v904, 0.0
    %907 = vadd.xlane.f32.xlu0 %v906
    %v908 = vpop.xlane.xlu0 %907
    %v909 = vmax.f32 %v908, 1e-09
    %v910 = vrcp.pop %v909
    %v911 = vmul.f32 %v899, %v910
    %v912 = vld [vmem:[%s16] sm:$0x1]
    %v914 = vlaneseq
    %v915 = vshrl.u32 %v914, 7
    %v916 = vsub.s32 0, %v915
    %v917 = vrot.slane %v912, %v916
    %v919 = vadd.f32 %v911, %v917
    %v920 = vpack.c.bf16 %v919, %v919
    %v921 = vld [vmem:[%s17] sm:$0xf]
    %v922 = vld [vmem:[%s17 + $0x4] sm:$0xf]
    %v923 = vld [vmem:[%s17 + $0x8] sm:$0xf]
    %v924 = vld [vmem:[%s17 + $0xc] sm:$0xf]
    %v925 = vld [vmem:[%s17 + $0x10] sm:$0xf]
    %v926 = vld [vmem:[%s17 + $0x14] sm:$0xf]
    %v927 = vld [vmem:[%s17 + $0x18] sm:$0xf]
    %v928 = vld [vmem:[%s17 + $0x1c] sm:$0xf]
    %v929 = vld [vmem:[%s17 + $0x20] sm:$0xf]
    %v930 = vld [vmem:[%s17 + $0x24] sm:$0xf]
    %v931 = vld [vmem:[%s17 + $0x28] sm:$0xf]
    %v932 = vld [vmem:[%s17 + $0x2c] sm:$0xf]
    %v933 = vld [vmem:[%s17 + $0x30] sm:$0xf]
    %v934 = vld [vmem:[%s17 + $0x34] sm:$0xf]
    %v935 = vld [vmem:[%s17 + $0x38] sm:$0xf]
    %v936 = vld [vmem:[%s17 + $0x3c] sm:$0xf]
    %v937 = vld [vmem:[%s18] sm:$0x1]
    %v939 = vlaneseq
    %v940 = vshrl.u32 %v939, 7
    %v941 = vsub.s32 0, %v940
    %v942 = vrot.slane %v937, %v941
    %v960 = vunpack.c.l.b16 %v921
    %v961 = vunpack.c.l.b16 %v922
    %v962 = vunpack.c.l.b16 %v923
    %v963 = vunpack.c.l.b16 %v924
    %v964 = vunpack.c.l.b16 %v925
    %v965 = vunpack.c.l.b16 %v926
    %v966 = vunpack.c.l.b16 %v927
    %v967 = vunpack.c.l.b16 %v928
    %v968 = vunpack.c.l.b16 %v929
    %v969 = vunpack.c.l.b16 %v930
    %v970 = vunpack.c.l.b16 %v931
    %v971 = vunpack.c.l.b16 %v932
    %v972 = vunpack.c.l.b16 %v933
    %v973 = vunpack.c.l.b16 %v934
    %v974 = vunpack.c.l.b16 %v935
    %v975 = vunpack.c.l.b16 %v936
    %v976 = vpack.c.b16 %v961, %v960
    %v977 = vpack.c.b16 %v963, %v962
    %v978 = vpack.c.b16 %v965, %v964
    %v979 = vpack.c.b16 %v967, %v966
    %v980 = vpack.c.b16 %v969, %v968
    %v981 = vpack.c.b16 %v971, %v970
    %v982 = vpack.c.b16 %v973, %v972
    %v983 = vpack.c.b16 %v975, %v974
    %992 = vmatprep.subr.bf16.mxu0 0
    %993 = vmatpush1.bf16.msra.mxu0 %v983
    %994 = vmatprep.subr.bf16.mxu0 0
    %995 = vmatpush1.bf16.msra.mxu0 %v982
    %996 = vmatprep.subr.bf16.mxu0 0
    %997 = vmatpush1.bf16.msra.mxu0 %v981
    %998 = vmatprep.subr.bf16.mxu0 0
    %999 = vmatpush1.bf16.msra.mxu0 %v980
    %1000 = vmatprep.subr.bf16.mxu0 0
    %1001 = vmatpush1.bf16.msra.mxu0 %v979
    %1002 = vmatprep.subr.bf16.mxu0 0
    %1003 = vmatpush1.bf16.msra.mxu0 %v978
    %1004 = vmatprep.subr.bf16.mxu0 0
    %1005 = vmatpush1.bf16.msra.mxu0 %v977
    %1006 = vmatprep.subr.bf16.mxu0 0
    %1007 = vmatpush1.bf16.msra.mxu0 %v976
    %1008 = vmatprep.subr.bf16.mxu0 0
    %1009 = vmatpush2.bf16.msra.mxu0 0
    %1010 = vmatprep.subr.bf16.mxu0 0
    %1011 = vmatpush2.bf16.msra.mxu0 0
    %1012 = vmatprep.subr.bf16.mxu0 0
    %1013 = vmatpush2.bf16.msra.mxu0 0
    %1014 = vmatprep.subr.bf16.mxu0 0
    %1015 = vmatpush2.bf16.msra.mxu0 0
    %1016 = vmatprep.subr.bf16.mxu0 0
    %1017 = vmatpush2.bf16.msra.mxu0 0
    %1018 = vmatprep.subr.bf16.mxu0 0
    %1019 = vmatpush2.bf16.msra.mxu0 0
    %1020 = vmatprep.subr.bf16.mxu0 0
    %1021 = vmatpush2.bf16.msra.mxu0 0
    %1022 = vmatprep.subr.bf16.mxu0 0
    %1023 = vmatpush2.bf16.msra.mxu0 0
    %1024 = vmatprep.mubr.bf16.mxu0 0
    %1025 = vmatmul.mubr.bf16.gmra.mxu0 %v920
    %v1026 = vpop.f32.mrf.mxu0
    %v1027 = vadd.f32 %v942, %v1026
    %v1028 = vpop.f32.mrf.mxu0
    %v1029 = vpop.f32.mrf.mxu0
    %v1030 = vpop.f32.mrf.mxu0
    %1031 = vdwg.mxu0
    %v1032 = vmul.f32 %v1027, %v1027
    %v1033 = vmul.f32 %v1027, %v1032
    %v1034 = vmul.f32 %v1033, 0.044715
    %v1035 = vadd.f32 %v1027, %v1034
    %v1036 = vmul.f32 %v1035, 0.7978846
    %v1037 = vtanh.pop %v1036
    %v1038 = vadd.f32 %v1037, 1.0
    %v1039 = vmul.f32 %v1038, 0.5
    %v1040 = vmul.f32 %v1027, %v1039
    %v1041 = vpack.c.bf16 %v1040, %v1040
    %v1042 = vld [vmem:[%s19] sm:$0xf]
    %v1043 = vld [vmem:[%s19 + $0x4] sm:$0xf]
    %v1044 = vld [vmem:[%s19 + $0x8] sm:$0xf]
    %v1045 = vld [vmem:[%s19 + $0xc] sm:$0xf]
    %v1046 = vld [vmem:[%s19 + $0x10] sm:$0xf]
    %v1047 = vld [vmem:[%s19 + $0x14] sm:$0xf]
    %v1048 = vld [vmem:[%s19 + $0x18] sm:$0xf]
    %v1049 = vld [vmem:[%s19 + $0x1c] sm:$0xf]
    %v1050 = vld [vmem:[%s19 + $0x20] sm:$0xf]
    %v1051 = vld [vmem:[%s19 + $0x24] sm:$0xf]
    %v1052 = vld [vmem:[%s19 + $0x28] sm:$0xf]
    %v1053 = vld [vmem:[%s19 + $0x2c] sm:$0xf]
    %v1054 = vld [vmem:[%s19 + $0x30] sm:$0xf]
    %v1055 = vld [vmem:[%s19 + $0x34] sm:$0xf]
    %v1056 = vld [vmem:[%s19 + $0x38] sm:$0xf]
    %v1057 = vld [vmem:[%s19 + $0x3c] sm:$0xf]
    %v1058 = vld [vmem:[%s20] sm:$0x1]
    %v1060 = vlaneseq
    %v1061 = vshrl.u32 %v1060, 7
    %v1062 = vsub.s32 0, %v1061
    %v1063 = vrot.slane %v1058, %v1062
    %v1081 = vunpack.c.l.b16 %v1042
    %v1082 = vunpack.c.l.b16 %v1043
    %v1083 = vunpack.c.l.b16 %v1044
    %v1084 = vunpack.c.l.b16 %v1045
    %v1085 = vunpack.c.l.b16 %v1046
    %v1086 = vunpack.c.l.b16 %v1047
    %v1087 = vunpack.c.l.b16 %v1048
    %v1088 = vunpack.c.l.b16 %v1049
    %v1089 = vunpack.c.l.b16 %v1050
    %v1090 = vunpack.c.l.b16 %v1051
    %v1091 = vunpack.c.l.b16 %v1052
    %v1092 = vunpack.c.l.b16 %v1053
    %v1093 = vunpack.c.l.b16 %v1054
    %v1094 = vunpack.c.l.b16 %v1055
    %v1095 = vunpack.c.l.b16 %v1056
    %v1096 = vunpack.c.l.b16 %v1057
    %v1097 = vpack.c.b16 %v1082, %v1081
    %v1098 = vpack.c.b16 %v1084, %v1083
    %v1099 = vpack.c.b16 %v1086, %v1085
    %v1100 = vpack.c.b16 %v1088, %v1087
    %v1101 = vpack.c.b16 %v1090, %v1089
    %v1102 = vpack.c.b16 %v1092, %v1091
    %v1103 = vpack.c.b16 %v1094, %v1093
    %v1104 = vpack.c.b16 %v1096, %v1095
    %1113 = vmatprep.subr.bf16.mxu0 0
    %1114 = vmatpush1.bf16.msra.mxu0 %v1104
    %1115 = vmatprep.subr.bf16.mxu0 0
    %1116 = vmatpush1.bf16.msra.mxu0 %v1103
    %1117 = vmatprep.subr.bf16.mxu0 0
    %1118 = vmatpush1.bf16.msra.mxu0 %v1102
    %1119 = vmatprep.subr.bf16.mxu0 0
    %1120 = vmatpush1.bf16.msra.mxu0 %v1101
    %1121 = vmatprep.subr.bf16.mxu0 0
    %1122 = vmatpush1.bf16.msra.mxu0 %v1100
    %1123 = vmatprep.subr.bf16.mxu0 0
    %1124 = vmatpush1.bf16.msra.mxu0 %v1099
    %1125 = vmatprep.subr.bf16.mxu0 0
    %1126 = vmatpush1.bf16.msra.mxu0 %v1098
    %1127 = vmatprep.subr.bf16.mxu0 0
    %1128 = vmatpush1.bf16.msra.mxu0 %v1097
    %1129 = vmatprep.subr.bf16.mxu0 0
    %1130 = vmatpush2.bf16.msra.mxu0 0
    %1131 = vmatprep.subr.bf16.mxu0 0
    %1132 = vmatpush2.bf16.msra.mxu0 0
    %1133 = vmatprep.subr.bf16.mxu0 0
    %1134 = vmatpush2.bf16.msra.mxu0 0
    %1135 = vmatprep.subr.bf16.mxu0 0
    %1136 = vmatpush2.bf16.msra.mxu0 0
    %1137 = vmatprep.subr.bf16.mxu0 0
    %1138 = vmatpush2.bf16.msra.mxu0 0
    %1139 = vmatprep.subr.bf16.mxu0 0
    %1140 = vmatpush2.bf16.msra.mxu0 0
    %1141 = vmatprep.subr.bf16.mxu0 0
    %1142 = vmatpush2.bf16.msra.mxu0 0
    %1143 = vmatprep.subr.bf16.mxu0 0
    %1144 = vmatpush2.bf16.msra.mxu0 0
    %1145 = vmatprep.mubr.bf16.mxu0 0
    %1146 = vmatmul.mubr.bf16.gmra.mxu0 %v1041
    %v1147 = vpop.f32.mrf.mxu0
    %v1148 = vadd.f32 %v1063, %v1147
    %v1149 = vpop.f32.mrf.mxu0
    %v1150 = vpop.f32.mrf.mxu0
    %v1151 = vpop.f32.mrf.mxu0
    %1152 = vdwg.mxu0
    %v1153 = vmul.f32 %v1148, %v1148
    %v1154 = vsel %vm632, %v1153, 0.0
    %1155 = vadd.xlane.f32.xlu0 %v1154
    %v1156 = vpop.xlane.xlu0 %1155
    %v1157 = vmax.f32 %v1156, 1e-24
    %v1158 = vrsqrt.pop %v1157
    %v1159 = vmul.f32 %v1157, 0.5
    %v1160 = vmul.f32 %v1159, %v1158
    %v1161 = vmul.f32 %v1160, %v1158
    %v1162 = vsub.f32 1.5, %v1161
    %v1163 = vmul.f32 %v1158, %v1162
    %v1164 = vmul.f32 %v1148, %v1163
    %1165 = vst [vmem:[#allocation4] sm:$0x3] %v1164
    // Predicated region
    $region86: #{_forward_impl.1} parent=1 // pred_check
      _
    $region87: #{_forward_impl.1} parent=1 // pred_check_branch
      %1167 = sbr.rel (0) target = $region89
    $region88: #{_forward_impl.1} parent=1 // pred_region
      %s1169 = ssub.s32 32, 32
      %1170 = vsyncadd [#allocation3], %s1169
      %s1172 = sshll.u32 [#allocation2], 4
      %s1173 = int_to_ptr.vmem [resolvable:$true] %s1172
      %1175 = dma.vmem_to_hbm [thread:$0]  %s1173, 32, %s21, [#allocation3]
    $region89: #{_forward_impl.1} parent=1 // pred_fallthru
      _
    // Predicated region
    $region90: #{_forward_impl.1} parent=1 // pred_check
      _
    $region91: #{_forward_impl.1} parent=1 // pred_check_branch
      %1177 = sbr.rel (0) target = $region93
    $region92: #{_forward_impl.1} parent=1 // pred_region
      %s1179 = ssub.s32 32, 32
      %1180 = vsyncadd [#allocation5], %s1179
      %s1182 = sshll.u32 [#allocation4], 4
      %s1183 = int_to_ptr.vmem [resolvable:$true] %s1182
      %1185 = dma.vmem_to_hbm [thread:$0]  %s1183, 32, %s22, [#allocation5]
    $region93: #{_forward_impl.1} parent=1 // pred_fallthru
      _
    // Predicated region
    $region94: #{_forward_impl.1} parent=1 // pred_check
      _
    $region95: #{_forward_impl.1} parent=1 // pred_check_branch
      %1187 = sbr.rel (0) target = $region97
    $region96: #{_forward_impl.1} parent=1 // pred_region
      %1188 = dma.done [#allocation3], 32
    $region97: #{_forward_impl.1} parent=1 // pred_fallthru
      _
    // Predicated region
    $region98: #{_forward_impl.1} parent=1 // pred_check
      _
    $region99: #{_forward_impl.1} parent=1 // pred_check_branch
      %1190 = sbr.rel (0) target = $region101
    $region100: #{_forward_impl.1} parent=1 // pred_region
      %1191 = dma.done [#allocation5], 32
    $region101: #{_forward_impl.1} parent=1 // pred_fallthru
      _
    %1192 = vsyncpa [#allocation3], 1
    %1193 = vsyncpa [#allocation5], 1

</llo_original>
